<compile_context>
chip_gen: v5e
topology: v5e:2x2
jax: 0.10.0
libtpu: 0.0.40
codegen_flags: <defaults>
</compile_context>

<pallas_src>
import math
import jax
import jax.numpy as jnp
from jax.experimental import pallas as pl
from jax.experimental.pallas import tpu as pltpu


WEIGHT_ORDER = ("wqkv", "bqkv", "wo", "bo", "g1", "be1",
                "w1", "b1", "w2", "b2", "g2", "be2")


def make_fused_kernel(B, S, D, H, F, L):
    hd = D // H
    N = B * S
    eps = 1e-5
    bf16 = jnp.bfloat16

    def kernel(x_ref,
               wqkv_ref, bqkv_ref, wo_ref, bo_ref,
               g1_ref, be1_ref, w1_ref, b1_ref,
               w2_ref, b2_ref, g2_ref, be2_ref,
               o_ref):
        x = x_ref[...]                                                       # (N, D) f32

        for l in range(L):        # static unroll: whole forward stays in VMEM/vregs
            # ---- fused QKV projection (scale folded into the q third of wqkv/bqkv) ----
            qkv = jnp.dot(x.astype(bf16), wqkv_ref[l],
                          preferred_element_type=jnp.float32) + bqkv_ref[l]  # (N, 3D) f32

            # Stack heads along a leading (H*B) batch axis -> single batched einsums.
            def split_heads(base):
                return jnp.concatenate(
                    [qkv[:, base + h * hd: base + (h + 1) * hd].reshape(B, S, hd)
                     for h in range(H)], axis=0).astype(bf16)                # (H*B, S, hd)

            qh = split_heads(0)
            kh = split_heads(D)
            vh = split_heads(2 * D)

            s = jnp.einsum('bqd,bkd->bqk', qh, kh,
                           preferred_element_type=jnp.float32)               # (H*B, S, S) f32
            s = s - jnp.max(s, axis=-1, keepdims=True)
            p = jnp.exp(s)
            p = p * pl.reciprocal(jnp.sum(p, axis=-1, keepdims=True), approx=True)

            ctx = jnp.einsum('bqk,bkd->bqd', p.astype(bf16), vh,
                             preferred_element_type=jnp.float32)             # (H*B, S, hd) f32

            # Output projection folded per head: concat_h(ctx_h) @ Wo == sum_h ctx_h @ Wo[h].
            ctx = ctx.reshape(H, N, hd).astype(bf16)
            attn = jnp.sum(
                jnp.einsum('hnd,hde->hne', ctx, wo_ref[l],
                           preferred_element_type=jnp.float32),
                axis=0) + bo_ref[l]                                          # (N, D) f32

            # ---- residual + LayerNorm 1 (post-norm), f32 ----
            h1 = x + attn
            mu1 = jnp.mean(h1, axis=-1, keepdims=True)
            var1 = jnp.mean((h1 - mu1) ** 2, axis=-1, keepdims=True)
            y = (h1 - mu1) * jax.lax.rsqrt(var1 + eps) * g1_ref[l] + be1_ref[l]

            # ---- feed-forward (bf16 MXU operands, f32 accumulate / elementwise) ----
            ff = jnp.dot(y.astype(bf16), w1_ref[l],
                         preferred_element_type=jnp.float32) + b1_ref[l]
            ff = jnp.maximum(ff, 0.0)
            ff = jnp.dot(ff.astype(bf16), w2_ref[l],
                         preferred_element_type=jnp.float32) + b2_ref[l]

            # ---- residual + LayerNorm 2, f32 ----
            h2 = y + ff
            mu2 = jnp.mean(h2, axis=-1, keepdims=True)
            var2 = jnp.mean((h2 - mu2) ** 2, axis=-1, keepdims=True)
            x = (h2 - mu2) * jax.lax.rsqrt(var2 + eps) * g2_ref[l] + be2_ref[l]

        o_ref[...] = x.astype(o_ref.dtype)

    return kernel


def set_transformer_forward(x, stacked, num_heads):
    """Full SetTransformer forward (all layers, whole batch) in a single pallas_call."""
    B, S, D = x.shape
    L = stacked["wqkv"].shape[0]
    F = stacked["w1"].shape[-1]
    N = B * S

    kernel = make_fused_kernel(B, S, D, num_heads, F, L)
    weights = [stacked[name] for name in WEIGHT_ORDER]

    def full_spec(shape):
        n = len(shape)
        return pl.BlockSpec(shape, lambda i, n=n: (0,) * n)

    x2 = x.reshape(N, D)  # free host-side view: flatten batch into matmul rows

    out = pl.pallas_call(
        kernel,
        out_shape=jax.ShapeDtypeStruct((N, D), x.dtype),
        grid=(1,),
        in_specs=[full_spec((N, D))] + [full_spec(tuple(w.shape)) for w in weights],
        out_specs=full_spec((N, D)),
        compiler_params=pltpu.CompilerParams(
            dimension_semantics=("arbitrary",)),
    )(x2, *weights)
    return out.reshape(B, S, D)


def init_layer_params(key, dim, dim_ff=512):
    """Deterministic synthetic nn.TransformerEncoderLayer weights in PyTorch layout."""
    ks = jax.random.split(key, 6)
    s = 0.05
    return {
        "in_proj_w": s * jax.random.normal(ks[0], (3 * dim, dim), jnp.float32),
        "in_proj_b": s * jax.random.normal(ks[1], (3 * dim,), jnp.float32),
        "out_w":     s * jax.random.normal(ks[2], (dim, dim), jnp.float32),
        "out_b":     s * jax.random.normal(ks[3], (dim,), jnp.float32),
        "ln1_g": jnp.ones((dim,), jnp.float32), "ln1_b": jnp.zeros((dim,), jnp.float32),
        "ln2_g": jnp.ones((dim,), jnp.float32), "ln2_b": jnp.zeros((dim,), jnp.float32),
        "lin1_w": s * jax.random.normal(ks[4], (dim_ff, dim), jnp.float32),
        "lin1_b": jnp.zeros((dim_ff,), jnp.float32),
        "lin2_w": s * jax.random.normal(ks[5], (dim, dim_ff), jnp.float32),
        "lin2_b": jnp.zeros((dim,), jnp.float32),
    }


def prepare_params(layer_params, dim, num_heads):
    """x@W layout, fused QKV, 1/sqrt(head_dim) folded into Wq/bq, bf16 matmul weights, stacked over layers."""
    hd = dim // num_heads
    scale = 1.0 / math.sqrt(hd)
    per_layer = []
    for p in layer_params:
        w_in, b_in = p["in_proj_w"], p["in_proj_b"]
        wq = (w_in[0 * dim:1 * dim] * scale).T
        wk = w_in[1 * dim:2 * dim].T
        wv = w_in[2 * dim:3 * dim].T
        bq = b_in[0 * dim:1 * dim] * scale
        bk = b_in[1 * dim:2 * dim]
        bv = b_in[2 * dim:3 * dim]
        per_layer.append({
            "wqkv": jnp.concatenate([wq, wk, wv], axis=1).astype(jnp.bfloat16),   # (D, 3D)
            "bqkv": jnp.concatenate([bq, bk, bv])[None, :],                        # (1, 3D) f32
            "wo":   p["out_w"].T.reshape(num_heads, hd, dim).astype(jnp.bfloat16),  # (H, hd, D)
            "bo":   p["out_b"][None, :],
            "g1": p["ln1_g"][None, :], "be1": p["ln1_b"][None, :],
            "w1": p["lin1_w"].T.astype(jnp.bfloat16), "b1": p["lin1_b"][None, :],
            "w2": p["lin2_w"].T.astype(jnp.bfloat16), "b2": p["lin2_b"][None, :],
            "g2": p["ln2_g"][None, :], "be2": p["ln2_b"][None, :],
        })
    return {k: jnp.stack([lp[k] for lp in per_layer]) for k in WEIGHT_ORDER}


def _layer_norm(x, g, b, eps=1e-5):
    mu = jnp.mean(x, axis=-1, keepdims=True)
    var = jnp.mean((x - mu) ** 2, axis=-1, keepdims=True)
    return (x - mu) * jax.lax.rsqrt(var + eps) * g + b


def reference_forward(x, layer_params, num_heads):
    """Pure-JAX f32 reference matching nn.TransformerEncoderLayer (post-norm, relu, eval)."""
    B, S, D = x.shape
    H, hd = num_heads, D // num_heads
    out = x
    for p in layer_params:
        w_in, b_in = p["in_proj_w"], p["in_proj_b"]
        q = out @ w_in[:D].T + b_in[:D]
        k = out @ w_in[D:2 * D].T + b_in[D:2 * D]
        v = out @ w_in[2 * D:].T + b_in[2 * D:]

        def heads(t):
            return t.reshape(B, S, H, hd).transpose(0, 2, 1, 3)

        qh, kh, vh = heads(q), heads(k), heads(v)
        s = jnp.einsum('bhqd,bhkd->bhqk', qh, kh) / math.sqrt(hd)
        a = jax.nn.softmax(s, axis=-1)
        ctx = jnp.einsum('bhqk,bhkd->bhqd', a, vh).transpose(0, 2, 1, 3).reshape(B, S, D)
        attn = ctx @ p["out_w"].T + p["out_b"]
        h1 = _layer_norm(out + attn, p["ln1_g"], p["ln1_b"])
        ff = jnp.maximum(h1 @ p["lin1_w"].T + p["lin1_b"], 0.0) @ p["lin2_w"].T + p["lin2_b"]
        out = _layer_norm(h1 + ff, p["ln2_g"], p["ln2_b"])
    return out


if __name__ == "__main__":
    # SetTransformer(dim=32, num_heads=4, num_layers=2); inputs: (batch=2, seq=8, dim=32)
    dim, num_heads, num_layers = 32, 4, 2
    B, S = 2, 8

    root = jax.random.PRNGKey(0)
    k_in, *k_layers = jax.random.split(root, 1 + num_layers)
    inputs = jax.random.normal(k_in, (B, S, dim), jnp.float32)
    layer_params = [init_layer_params(k, dim) for k in k_layers]
    stacked = prepare_params(layer_params, dim, num_heads)

    out = set_transformer_forward(inputs, stacked, num_heads)
    out = jax.block_until_ready(out)

    assert out.shape == (B, S, dim) and out.dtype == jnp.float32
    assert bool(jnp.all(jnp.isfinite(out)))

    # Tolerance check vs. f32 pure-JAX reference (kernel uses bf16 MXU operands + approx reciprocal,
    # so exact equality is not expected).
    ref = reference_forward(inputs, layer_params, num_heads)
    max_err = float(jnp.max(jnp.abs(out - ref)))
    assert max_err < 1e-1, f"max abs error vs f32 reference too large: {max_err}"

    print("KERNEL_OK")
</pallas_src>

<mosaic_0001>
module attributes {stable_mosaic.version = 11 : i64} {
  func.func @kernel(%arg0: i32, %arg1: memref<16x32xf32, #tpu.memory_space<vmem>>, %arg2: memref<2x32x96xbf16, #tpu.memory_space<vmem>>, %arg3: memref<2x1x96xf32, #tpu.memory_space<vmem>>, %arg4: memref<2x4x8x32xbf16, #tpu.memory_space<vmem>>, %arg5: memref<2x1x32xf32, #tpu.memory_space<vmem>>, %arg6: memref<2x1x32xf32, #tpu.memory_space<vmem>>, %arg7: memref<2x1x32xf32, #tpu.memory_space<vmem>>, %arg8: memref<2x32x512xbf16, #tpu.memory_space<vmem>>, %arg9: memref<2x1x512xf32, #tpu.memory_space<vmem>>, %arg10: memref<2x512x32xbf16, #tpu.memory_space<vmem>>, %arg11: memref<2x1x32xf32, #tpu.memory_space<vmem>>, %arg12: memref<2x1x32xf32, #tpu.memory_space<vmem>>, %arg13: memref<2x1x32xf32, #tpu.memory_space<vmem>>, %arg14: memref<16x32xf32, #tpu.memory_space<vmem>>) attributes {dimension_semantics = [#tpu.dimension_semantics<arbitrary>], iteration_bounds = array<i64: 1>, scalar_prefetch = 0 : i64, scratch_operands = 0 : i64, tpu.core_type = #tpu.core_type<tc>, window_params = [{pipeline_mode = #tpu.pipeline_mode<synchronous>, transform_indices = @transform_0, window_bounds = array<i64: 16, 32>}, {pipeline_mode = #tpu.pipeline_mode<synchronous>, transform_indices = @transform_1, window_bounds = array<i64: 2, 32, 96>}, {pipeline_mode = #tpu.pipeline_mode<synchronous>, transform_indices = @transform_2, window_bounds = array<i64: 2, 1, 96>}, {pipeline_mode = #tpu.pipeline_mode<synchronous>, transform_indices = @transform_3, window_bounds = array<i64: 2, 4, 8, 32>}, {pipeline_mode = #tpu.pipeline_mode<synchronous>, transform_indices = @transform_4, window_bounds = array<i64: 2, 1, 32>}, {pipeline_mode = #tpu.pipeline_mode<synchronous>, transform_indices = @transform_5, window_bounds = array<i64: 2, 1, 32>}, {pipeline_mode = #tpu.pipeline_mode<synchronous>, transform_indices = @transform_6, window_bounds = array<i64: 2, 1, 32>}, {pipeline_mode = #tpu.pipeline_mode<synchronous>, transform_indices = @transform_7, window_bounds = array<i64: 2, 32, 512>}, {pipeline_mode = #tpu.pipeline_mode<synchronous>, transform_indices = @transform_8, window_bounds = array<i64: 2, 1, 512>}, {pipeline_mode = #tpu.pipeline_mode<synchronous>, transform_indices = @transform_9, window_bounds = array<i64: 2, 512, 32>}, {pipeline_mode = #tpu.pipeline_mode<synchronous>, transform_indices = @transform_10, window_bounds = array<i64: 2, 1, 32>}, {pipeline_mode = #tpu.pipeline_mode<synchronous>, transform_indices = @transform_11, window_bounds = array<i64: 2, 1, 32>}, {pipeline_mode = #tpu.pipeline_mode<synchronous>, transform_indices = @transform_12, window_bounds = array<i64: 2, 1, 32>}, {pipeline_mode = #tpu.pipeline_mode<synchronous>, transform_indices = @transform_13, window_bounds = array<i64: 16, 32>}]} {
    %c0 = arith.constant 0 : index
    %c0_0 = arith.constant 0 : index
    %0 = vector.load %arg1[%c0, %c0_0] : memref<16x32xf32, #tpu.memory_space<vmem>>, vector<16x32xf32>
    %1 = arith.truncf %0 : vector<16x32xf32> to vector<16x32xbf16>
    %c0_1 = arith.constant 0 : index
    %c0_2 = arith.constant 0 : index
    %c0_3 = arith.constant 0 : index
    %2 = vector.load %arg2[%c0_1, %c0_2, %c0_3] : memref<2x32x96xbf16, #tpu.memory_space<vmem>>, vector<1x32x96xbf16>
    %3 = vector.shape_cast %2 : vector<1x32x96xbf16> to vector<32x96xbf16>
    %cst = arith.constant dense<0.000000e+00> : vector<16x96xf32>
    %4 = tpu.matmul %1, %3, %cst {dimension_numbers = #tpu.dot_dimension_numbers<[1], [0], [0], [1], [0, 0, 1, 1], [], []>} : vector<16x32xbf16>, vector<32x96xbf16>, vector<16x96xf32> -> vector<16x96xf32>
    %c0_4 = arith.constant 0 : index
    %c0_5 = arith.constant 0 : index
    %c0_6 = arith.constant 0 : index
    %5 = vector.load %arg3[%c0_4, %c0_5, %c0_6] : memref<2x1x96xf32, #tpu.memory_space<vmem>>, vector<1x1x96xf32>
    %6 = vector.shape_cast %5 : vector<1x1x96xf32> to vector<1x96xf32>
    %7 = vector.broadcast %6 : vector<1x96xf32> to vector<16x96xf32>
    %8 = arith.addf %4, %7 : vector<16x96xf32>
    %9 = vector.extract_strided_slice %8 {offsets = [0, 0], sizes = [16, 8], strides = [1, 1]} : vector<16x96xf32> to vector<16x8xf32>
    %10 = vector.shape_cast %9 : vector<16x8xf32> to vector<2x8x8xf32>
    %11 = vector.extract_strided_slice %8 {offsets = [0, 8], sizes = [16, 8], strides = [1, 1]} : vector<16x96xf32> to vector<16x8xf32>
    %12 = vector.shape_cast %11 : vector<16x8xf32> to vector<2x8x8xf32>
    %13 = vector.extract_strided_slice %8 {offsets = [0, 16], sizes = [16, 8], strides = [1, 1]} : vector<16x96xf32> to vector<16x8xf32>
    %14 = vector.shape_cast %13 : vector<16x8xf32> to vector<2x8x8xf32>
    %15 = vector.extract_strided_slice %8 {offsets = [0, 24], sizes = [16, 8], strides = [1, 1]} : vector<16x96xf32> to vector<16x8xf32>
    %16 = vector.shape_cast %15 : vector<16x8xf32> to vector<2x8x8xf32>
    %17 = tpu.concatenate %10, %12, %14, %16 in 0 : vector<2x8x8xf32>, vector<2x8x8xf32>, vector<2x8x8xf32>, vector<2x8x8xf32> -> vector<8x8x8xf32>
    %18 = arith.truncf %17 : vector<8x8x8xf32> to vector<8x8x8xbf16>
    %19 = vector.extract_strided_slice %8 {offsets = [0, 32], sizes = [16, 8], strides = [1, 1]} : vector<16x96xf32> to vector<16x8xf32>
    %20 = vector.shape_cast %19 : vector<16x8xf32> to vector<2x8x8xf32>
    %21 = vector.extract_strided_slice %8 {offsets = [0, 40], sizes = [16, 8], strides = [1, 1]} : vector<16x96xf32> to vector<16x8xf32>
    %22 = vector.shape_cast %21 : vector<16x8xf32> to vector<2x8x8xf32>
    %23 = vector.extract_strided_slice %8 {offsets = [0, 48], sizes = [16, 8], strides = [1, 1]} : vector<16x96xf32> to vector<16x8xf32>
    %24 = vector.shape_cast %23 : vector<16x8xf32> to vector<2x8x8xf32>
    %25 = vector.extract_strided_slice %8 {offsets = [0, 56], sizes = [16, 8], strides = [1, 1]} : vector<16x96xf32> to vector<16x8xf32>
    %26 = vector.shape_cast %25 : vector<16x8xf32> to vector<2x8x8xf32>
    %27 = tpu.concatenate %20, %22, %24, %26 in 0 : vector<2x8x8xf32>, vector<2x8x8xf32>, vector<2x8x8xf32>, vector<2x8x8xf32> -> vector<8x8x8xf32>
    %28 = arith.truncf %27 : vector<8x8x8xf32> to vector<8x8x8xbf16>
    %29 = vector.extract_strided_slice %8 {offsets = [0, 64], sizes = [16, 8], strides = [1, 1]} : vector<16x96xf32> to vector<16x8xf32>
    %30 = vector.shape_cast %29 : vector<16x8xf32> to vector<2x8x8xf32>
    %31 = vector.extract_strided_slice %8 {offsets = [0, 72], sizes = [16, 8], strides = [1, 1]} : vector<16x96xf32> to vector<16x8xf32>
    %32 = vector.shape_cast %31 : vector<16x8xf32> to vector<2x8x8xf32>
    %33 = vector.extract_strided_slice %8 {offsets = [0, 80], sizes = [16, 8], strides = [1, 1]} : vector<16x96xf32> to vector<16x8xf32>
    %34 = vector.shape_cast %33 : vector<16x8xf32> to vector<2x8x8xf32>
    %35 = vector.extract_strided_slice %8 {offsets = [0, 88], sizes = [16, 8], strides = [1, 1]} : vector<16x96xf32> to vector<16x8xf32>
    %36 = vector.shape_cast %35 : vector<16x8xf32> to vector<2x8x8xf32>
    %37 = tpu.concatenate %30, %32, %34, %36 in 0 : vector<2x8x8xf32>, vector<2x8x8xf32>, vector<2x8x8xf32>, vector<2x8x8xf32> -> vector<8x8x8xf32>
    %38 = arith.truncf %37 : vector<8x8x8xf32> to vector<8x8x8xbf16>
    "tpu.trace_start"() <{level = 10 : i32, message = "bqd,bkd->bqk"}> : () -> ()
    %cst_7 = arith.constant dense<0.000000e+00> : vector<8x8x8xf32>
    %39 = tpu.matmul %18, %28, %cst_7 {dimension_numbers = #tpu.dot_dimension_numbers<[2], [2], [1], [1], [0, 0, 0, 1, 1, 1], [0], [0]>} : vector<8x8x8xbf16>, vector<8x8x8xbf16>, vector<8x8x8xf32> -> vector<8x8x8xf32>
    "tpu.trace_stop"() : () -> ()
    %cst_8 = arith.constant dense<0xFF800000> : vector<8x8xf32>
    %40 = vector.multi_reduction <maximumf>, %39, %cst_8 [2] : vector<8x8x8xf32> to vector<8x8xf32>
    %41 = vector.shape_cast %40 : vector<8x8xf32> to vector<8x8x1xf32>
    %42 = vector.broadcast %41 : vector<8x8x1xf32> to vector<8x8x8xf32>
    %43 = arith.subf %39, %42 : vector<8x8x8xf32>
    %44 = math.exp %43 : vector<8x8x8xf32>
    %cst_9 = arith.constant dense<0.000000e+00> : vector<8x8xf32>
    %45 = vector.multi_reduction <add>, %44, %cst_9 [2] : vector<8x8x8xf32> to vector<8x8xf32>
    %46 = vector.shape_cast %45 : vector<8x8xf32> to vector<8x8x1xf32>
    %47 = tpu.reciprocal %46 {approx = true} : vector<8x8x1xf32> -> vector<8x8x1xf32>
    %48 = vector.broadcast %47 : vector<8x8x1xf32> to vector<8x8x8xf32>
    %49 = arith.mulf %44, %48 : vector<8x8x8xf32>
    %50 = arith.truncf %49 : vector<8x8x8xf32> to vector<8x8x8xbf16>
    "tpu.trace_start"() <{level = 10 : i32, message = "bqk,bkd->bqd"}> : () -> ()
    %cst_10 = arith.constant dense<0.000000e+00> : vector<8x8x8xf32>
    %51 = tpu.matmul %50, %38, %cst_10 {dimension_numbers = #tpu.dot_dimension_numbers<[2], [1], [1], [2], [0, 0, 0, 1, 1, 2], [0], [0]>} : vector<8x8x8xbf16>, vector<8x8x8xbf16>, vector<8x8x8xf32> -> vector<8x8x8xf32>
    "tpu.trace_stop"() : () -> ()
    %52 = vector.shape_cast %51 : vector<8x8x8xf32> to vector<4x16x8xf32>
    %53 = arith.truncf %52 : vector<4x16x8xf32> to vector<4x16x8xbf16>
    %c0_11 = arith.constant 0 : index
    %c0_12 = arith.constant 0 : index
    %c0_13 = arith.constant 0 : index
    %c0_14 = arith.constant 0 : index
    %54 = vector.load %arg4[%c0_11, %c0_12, %c0_13, %c0_14] : memref<2x4x8x32xbf16, #tpu.memory_space<vmem>>, vector<1x4x8x32xbf16>
    %55 = vector.shape_cast %54 : vector<1x4x8x32xbf16> to vector<4x8x32xbf16>
    "tpu.trace_start"() <{level = 10 : i32, message = "hnd,hde->hne"}> : () -> ()
    %cst_15 = arith.constant dense<0.000000e+00> : vector<4x16x32xf32>
    %56 = tpu.matmul %53, %55, %cst_15 {dimension_numbers = #tpu.dot_dimension_numbers<[2], [1], [1], [2], [0, 0, 0, 1, 1, 2], [0], [0]>} : vector<4x16x8xbf16>, vector<4x8x32xbf16>, vector<4x16x32xf32> -> vector<4x16x32xf32>
    "tpu.trace_stop"() : () -> ()
    %cst_16 = arith.constant dense<0.000000e+00> : vector<16x32xf32>
    %57 = vector.multi_reduction <add>, %56, %cst_16 [0] : vector<4x16x32xf32> to vector<16x32xf32>
    %c0_17 = arith.constant 0 : index
    %c0_18 = arith.constant 0 : index
    %c0_19 = arith.constant 0 : index
    %58 = vector.load %arg5[%c0_17, %c0_18, %c0_19] : memref<2x1x32xf32, #tpu.memory_space<vmem>>, vector<1x1x32xf32>
    %59 = vector.shape_cast %58 : vector<1x1x32xf32> to vector<1x32xf32>
    %60 = vector.broadcast %59 : vector<1x32xf32> to vector<16x32xf32>
    %61 = arith.addf %57, %60 : vector<16x32xf32>
    %62 = arith.addf %0, %61 : vector<16x32xf32>
    %cst_20 = arith.constant dense<0.000000e+00> : vector<16xf32>
    %63 = vector.multi_reduction <add>, %62, %cst_20 [1] : vector<16x32xf32> to vector<16xf32>
    %64 = vector.shape_cast %63 : vector<16xf32> to vector<16x1xf32>
    %cst_21 = arith.constant 3.200000e+01 : f32
    %65 = vector.broadcast %cst_21 : f32 to vector<16x1xf32>
    %66 = arith.divf %64, %65 : vector<16x1xf32>
    %67 = vector.broadcast %66 : vector<16x1xf32> to vector<16x32xf32>
    %68 = arith.subf %62, %67 : vector<16x32xf32>
    %69 = arith.mulf %68, %68 : vector<16x32xf32>
    %cst_22 = arith.constant dense<0.000000e+00> : vector<16xf32>
    %70 = vector.multi_reduction <add>, %69, %cst_22 [1] : vector<16x32xf32> to vector<16xf32>
    %71 = vector.shape_cast %70 : vector<16xf32> to vector<16x1xf32>
    %cst_23 = arith.constant 3.200000e+01 : f32
    %72 = vector.broadcast %cst_23 : f32 to vector<16x1xf32>
    %73 = arith.divf %71, %72 : vector<16x1xf32>
    %74 = vector.broadcast %66 : vector<16x1xf32> to vector<16x32xf32>
    %75 = arith.subf %62, %74 : vector<16x32xf32>
    %cst_24 = arith.constant 9.99999974E-6 : f32
    %76 = vector.broadcast %cst_24 : f32 to vector<16x1xf32>
    %77 = arith.addf %73, %76 : vector<16x1xf32>
    %78 = math.rsqrt %77 : vector<16x1xf32>
    %79 = vector.broadcast %78 : vector<16x1xf32> to vector<16x32xf32>
    %80 = arith.mulf %75, %79 : vector<16x32xf32>
    %c0_25 = arith.constant 0 : index
    %c0_26 = arith.constant 0 : index
    %c0_27 = arith.constant 0 : index
    %81 = vector.load %arg6[%c0_25, %c0_26, %c0_27] : memref<2x1x32xf32, #tpu.memory_space<vmem>>, vector<1x1x32xf32>
    %82 = vector.shape_cast %81 : vector<1x1x32xf32> to vector<1x32xf32>
    %83 = vector.broadcast %82 : vector<1x32xf32> to vector<16x32xf32>
    %84 = arith.mulf %80, %83 : vector<16x32xf32>
    %c0_28 = arith.constant 0 : index
    %c0_29 = arith.constant 0 : index
    %c0_30 = arith.constant 0 : index
    %85 = vector.load %arg7[%c0_28, %c0_29, %c0_30] : memref<2x1x32xf32, #tpu.memory_space<vmem>>, vector<1x1x32xf32>
    %86 = vector.shape_cast %85 : vector<1x1x32xf32> to vector<1x32xf32>
    %87 = vector.broadcast %86 : vector<1x32xf32> to vector<16x32xf32>
    %88 = arith.addf %84, %87 : vector<16x32xf32>
    %89 = arith.truncf %88 : vector<16x32xf32> to vector<16x32xbf16>
    %c0_31 = arith.constant 0 : index
    %c0_32 = arith.constant 0 : index
    %c0_33 = arith.constant 0 : index
    %90 = vector.load %arg8[%c0_31, %c0_32, %c0_33] : memref<2x32x512xbf16, #tpu.memory_space<vmem>>, vector<1x32x512xbf16>
    %91 = vector.shape_cast %90 : vector<1x32x512xbf16> to vector<32x512xbf16>
    %cst_34 = arith.constant dense<0.000000e+00> : vector<16x512xf32>
    %92 = tpu.matmul %89, %91, %cst_34 {dimension_numbers = #tpu.dot_dimension_numbers<[1], [0], [0], [1], [0, 0, 1, 1], [], []>} : vector<16x32xbf16>, vector<32x512xbf16>, vector<16x512xf32> -> vector<16x512xf32>
    %c0_35 = arith.constant 0 : index
    %c0_36 = arith.constant 0 : index
    %c0_37 = arith.constant 0 : index
    %93 = vector.load %arg9[%c0_35, %c0_36, %c0_37] : memref<2x1x512xf32, #tpu.memory_space<vmem>>, vector<1x1x512xf32>
    %94 = vector.shape_cast %93 : vector<1x1x512xf32> to vector<1x512xf32>
    %95 = vector.broadcast %94 : vector<1x512xf32> to vector<16x512xf32>
    %96 = arith.addf %92, %95 : vector<16x512xf32>
    %cst_38 = arith.constant 0.000000e+00 : f32
    %97 = vector.broadcast %cst_38 : f32 to vector<16x512xf32>
    %98 = arith.maximumf %96, %97 : vector<16x512xf32>
    %99 = arith.truncf %98 : vector<16x512xf32> to vector<16x512xbf16>
    %c0_39 = arith.constant 0 : index
    %c0_40 = arith.constant 0 : index
    %c0_41 = arith.constant 0 : index
    %100 = vector.load %arg10[%c0_39, %c0_40, %c0_41] : memref<2x512x32xbf16, #tpu.memory_space<vmem>>, vector<1x512x32xbf16>
    %101 = vector.shape_cast %100 : vector<1x512x32xbf16> to vector<512x32xbf16>
    %cst_42 = arith.constant dense<0.000000e+00> : vector<16x32xf32>
    %102 = tpu.matmul %99, %101, %cst_42 {dimension_numbers = #tpu.dot_dimension_numbers<[1], [0], [0], [1], [0, 0, 1, 1], [], []>} : vector<16x512xbf16>, vector<512x32xbf16>, vector<16x32xf32> -> vector<16x32xf32>
    %c0_43 = arith.constant 0 : index
    %c0_44 = arith.constant 0 : index
    %c0_45 = arith.constant 0 : index
    %103 = vector.load %arg11[%c0_43, %c0_44, %c0_45] : memref<2x1x32xf32, #tpu.memory_space<vmem>>, vector<1x1x32xf32>
    %104 = vector.shape_cast %103 : vector<1x1x32xf32> to vector<1x32xf32>
    %105 = vector.broadcast %104 : vector<1x32xf32> to vector<16x32xf32>
    %106 = arith.addf %102, %105 : vector<16x32xf32>
    %107 = arith.addf %88, %106 : vector<16x32xf32>
    %cst_46 = arith.constant dense<0.000000e+00> : vector<16xf32>
    %108 = vector.multi_reduction <add>, %107, %cst_46 [1] : vector<16x32xf32> to vector<16xf32>
    %109 = vector.shape_cast %108 : vector<16xf32> to vector<16x1xf32>
    %cst_47 = arith.constant 3.200000e+01 : f32
    %110 = vector.broadcast %cst_47 : f32 to vector<16x1xf32>
    %111 = arith.divf %109, %110 : vector<16x1xf32>
    %112 = vector.broadcast %111 : vector<16x1xf32> to vector<16x32xf32>
    %113 = arith.subf %107, %112 : vector<16x32xf32>
    %114 = arith.mulf %113, %113 : vector<16x32xf32>
    %cst_48 = arith.constant dense<0.000000e+00> : vector<16xf32>
    %115 = vector.multi_reduction <add>, %114, %cst_48 [1] : vector<16x32xf32> to vector<16xf32>
    %116 = vector.shape_cast %115 : vector<16xf32> to vector<16x1xf32>
    %cst_49 = arith.constant 3.200000e+01 : f32
    %117 = vector.broadcast %cst_49 : f32 to vector<16x1xf32>
    %118 = arith.divf %116, %117 : vector<16x1xf32>
    %119 = vector.broadcast %111 : vector<16x1xf32> to vector<16x32xf32>
    %120 = arith.subf %107, %119 : vector<16x32xf32>
    %cst_50 = arith.constant 9.99999974E-6 : f32
    %121 = vector.broadcast %cst_50 : f32 to vector<16x1xf32>
    %122 = arith.addf %118, %121 : vector<16x1xf32>
    %123 = math.rsqrt %122 : vector<16x1xf32>
    %124 = vector.broadcast %123 : vector<16x1xf32> to vector<16x32xf32>
    %125 = arith.mulf %120, %124 : vector<16x32xf32>
    %c0_51 = arith.constant 0 : index
    %c0_52 = arith.constant 0 : index
    %c0_53 = arith.constant 0 : index
    %126 = vector.load %arg12[%c0_51, %c0_52, %c0_53] : memref<2x1x32xf32, #tpu.memory_space<vmem>>, vector<1x1x32xf32>
    %127 = vector.shape_cast %126 : vector<1x1x32xf32> to vector<1x32xf32>
    %128 = vector.broadcast %127 : vector<1x32xf32> to vector<16x32xf32>
    %129 = arith.mulf %125, %128 : vector<16x32xf32>
    %c0_54 = arith.constant 0 : index
    %c0_55 = arith.constant 0 : index
    %c0_56 = arith.constant 0 : index
    %130 = vector.load %arg13[%c0_54, %c0_55, %c0_56] : memref<2x1x32xf32, #tpu.memory_space<vmem>>, vector<1x1x32xf32>
    %131 = vector.shape_cast %130 : vector<1x1x32xf32> to vector<1x32xf32>
    %132 = vector.broadcast %131 : vector<1x32xf32> to vector<16x32xf32>
    %133 = arith.addf %129, %132 : vector<16x32xf32>
    %134 = arith.truncf %133 : vector<16x32xf32> to vector<16x32xbf16>
    %c1 = arith.constant 1 : index
    %c0_57 = arith.constant 0 : index
    %c0_58 = arith.constant 0 : index
    %135 = vector.load %arg2[%c1, %c0_57, %c0_58] : memref<2x32x96xbf16, #tpu.memory_space<vmem>>, vector<1x32x96xbf16>
    %136 = vector.shape_cast %135 : vector<1x32x96xbf16> to vector<32x96xbf16>
    %cst_59 = arith.constant dense<0.000000e+00> : vector<16x96xf32>
    %137 = tpu.matmul %134, %136, %cst_59 {dimension_numbers = #tpu.dot_dimension_numbers<[1], [0], [0], [1], [0, 0, 1, 1], [], []>} : vector<16x32xbf16>, vector<32x96xbf16>, vector<16x96xf32> -> vector<16x96xf32>
    %c1_60 = arith.constant 1 : index
    %c0_61 = arith.constant 0 : index
    %c0_62 = arith.constant 0 : index
    %138 = vector.load %arg3[%c1_60, %c0_61, %c0_62] : memref<2x1x96xf32, #tpu.memory_space<vmem>>, vector<1x1x96xf32>
    %139 = vector.shape_cast %138 : vector<1x1x96xf32> to vector<1x96xf32>
    %140 = vector.broadcast %139 : vector<1x96xf32> to vector<16x96xf32>
    %141 = arith.addf %137, %140 : vector<16x96xf32>
    %142 = vector.extract_strided_slice %141 {offsets = [0, 0], sizes = [16, 8], strides = [1, 1]} : vector<16x96xf32> to vector<16x8xf32>
    %143 = vector.shape_cast %142 : vector<16x8xf32> to vector<2x8x8xf32>
    %144 = vector.extract_strided_slice %141 {offsets = [0, 8], sizes = [16, 8], strides = [1, 1]} : vector<16x96xf32> to vector<16x8xf32>
    %145 = vector.shape_cast %144 : vector<16x8xf32> to vector<2x8x8xf32>
    %146 = vector.extract_strided_slice %141 {offsets = [0, 16], sizes = [16, 8], strides = [1, 1]} : vector<16x96xf32> to vector<16x8xf32>
    %147 = vector.shape_cast %146 : vector<16x8xf32> to vector<2x8x8xf32>
    %148 = vector.extract_strided_slice %141 {offsets = [0, 24], sizes = [16, 8], strides = [1, 1]} : vector<16x96xf32> to vector<16x8xf32>
    %149 = vector.shape_cast %148 : vector<16x8xf32> to vector<2x8x8xf32>
    %150 = tpu.concatenate %143, %145, %147, %149 in 0 : vector<2x8x8xf32>, vector<2x8x8xf32>, vector<2x8x8xf32>, vector<2x8x8xf32> -> vector<8x8x8xf32>
    %151 = arith.truncf %150 : vector<8x8x8xf32> to vector<8x8x8xbf16>
    %152 = vector.extract_strided_slice %141 {offsets = [0, 32], sizes = [16, 8], strides = [1, 1]} : vector<16x96xf32> to vector<16x8xf32>
    %153 = vector.shape_cast %152 : vector<16x8xf32> to vector<2x8x8xf32>
    %154 = vector.extract_strided_slice %141 {offsets = [0, 40], sizes = [16, 8], strides = [1, 1]} : vector<16x96xf32> to vector<16x8xf32>
    %155 = vector.shape_cast %154 : vector<16x8xf32> to vector<2x8x8xf32>
    %156 = vector.extract_strided_slice %141 {offsets = [0, 48], sizes = [16, 8], strides = [1, 1]} : vector<16x96xf32> to vector<16x8xf32>
    %157 = vector.shape_cast %156 : vector<16x8xf32> to vector<2x8x8xf32>
    %158 = vector.extract_strided_slice %141 {offsets = [0, 56], sizes = [16, 8], strides = [1, 1]} : vector<16x96xf32> to vector<16x8xf32>
    %159 = vector.shape_cast %158 : vector<16x8xf32> to vector<2x8x8xf32>
    %160 = tpu.concatenate %153, %155, %157, %159 in 0 : vector<2x8x8xf32>, vector<2x8x8xf32>, vector<2x8x8xf32>, vector<2x8x8xf32> -> vector<8x8x8xf32>
    %161 = arith.truncf %160 : vector<8x8x8xf32> to vector<8x8x8xbf16>
    %162 = vector.extract_strided_slice %141 {offsets = [0, 64], sizes = [16, 8], strides = [1, 1]} : vector<16x96xf32> to vector<16x8xf32>
    %163 = vector.shape_cast %162 : vector<16x8xf32> to vector<2x8x8xf32>
    %164 = vector.extract_strided_slice %141 {offsets = [0, 72], sizes = [16, 8], strides = [1, 1]} : vector<16x96xf32> to vector<16x8xf32>
    %165 = vector.shape_cast %164 : vector<16x8xf32> to vector<2x8x8xf32>
    %166 = vector.extract_strided_slice %141 {offsets = [0, 80], sizes = [16, 8], strides = [1, 1]} : vector<16x96xf32> to vector<16x8xf32>
    %167 = vector.shape_cast %166 : vector<16x8xf32> to vector<2x8x8xf32>
    %168 = vector.extract_strided_slice %141 {offsets = [0, 88], sizes = [16, 8], strides = [1, 1]} : vector<16x96xf32> to vector<16x8xf32>
    %169 = vector.shape_cast %168 : vector<16x8xf32> to vector<2x8x8xf32>
    %170 = tpu.concatenate %163, %165, %167, %169 in 0 : vector<2x8x8xf32>, vector<2x8x8xf32>, vector<2x8x8xf32>, vector<2x8x8xf32> -> vector<8x8x8xf32>
    %171 = arith.truncf %170 : vector<8x8x8xf32> to vector<8x8x8xbf16>
    "tpu.trace_start"() <{level = 10 : i32, message = "bqd,bkd->bqk"}> : () -> ()
    %cst_63 = arith.constant dense<0.000000e+00> : vector<8x8x8xf32>
    %172 = tpu.matmul %151, %161, %cst_63 {dimension_numbers = #tpu.dot_dimension_numbers<[2], [2], [1], [1], [0, 0, 0, 1, 1, 1], [0], [0]>} : vector<8x8x8xbf16>, vector<8x8x8xbf16>, vector<8x8x8xf32> -> vector<8x8x8xf32>
    "tpu.trace_stop"() : () -> ()
    %cst_64 = arith.constant dense<0xFF800000> : vector<8x8xf32>
    %173 = vector.multi_reduction <maximumf>, %172, %cst_64 [2] : vector<8x8x8xf32> to vector<8x8xf32>
    %174 = vector.shape_cast %173 : vector<8x8xf32> to vector<8x8x1xf32>
    %175 = vector.broadcast %174 : vector<8x8x1xf32> to vector<8x8x8xf32>
    %176 = arith.subf %172, %175 : vector<8x8x8xf32>
    %177 = math.exp %176 : vector<8x8x8xf32>
    %cst_65 = arith.constant dense<0.000000e+00> : vector<8x8xf32>
    %178 = vector.multi_reduction <add>, %177, %cst_65 [2] : vector<8x8x8xf32> to vector<8x8xf32>
    %179 = vector.shape_cast %178 : vector<8x8xf32> to vector<8x8x1xf32>
    %180 = tpu.reciprocal %179 {approx = true} : vector<8x8x1xf32> -> vector<8x8x1xf32>
    %181 = vector.broadcast %180 : vector<8x8x1xf32> to vector<8x8x8xf32>
    %182 = arith.mulf %177, %181 : vector<8x8x8xf32>
    %183 = arith.truncf %182 : vector<8x8x8xf32> to vector<8x8x8xbf16>
    "tpu.trace_start"() <{level = 10 : i32, message = "bqk,bkd->bqd"}> : () -> ()
    %cst_66 = arith.constant dense<0.000000e+00> : vector<8x8x8xf32>
    %184 = tpu.matmul %183, %171, %cst_66 {dimension_numbers = #tpu.dot_dimension_numbers<[2], [1], [1], [2], [0, 0, 0, 1, 1, 2], [0], [0]>} : vector<8x8x8xbf16>, vector<8x8x8xbf16>, vector<8x8x8xf32> -> vector<8x8x8xf32>
    "tpu.trace_stop"() : () -> ()
    %185 = vector.shape_cast %184 : vector<8x8x8xf32> to vector<4x16x8xf32>
    %186 = arith.truncf %185 : vector<4x16x8xf32> to vector<4x16x8xbf16>
    %c1_67 = arith.constant 1 : index
    %c0_68 = arith.constant 0 : index
    %c0_69 = arith.constant 0 : index
    %c0_70 = arith.constant 0 : index
    %187 = vector.load %arg4[%c1_67, %c0_68, %c0_69, %c0_70] : memref<2x4x8x32xbf16, #tpu.memory_space<vmem>>, vector<1x4x8x32xbf16>
    %188 = vector.shape_cast %187 : vector<1x4x8x32xbf16> to vector<4x8x32xbf16>
    "tpu.trace_start"() <{level = 10 : i32, message = "hnd,hde->hne"}> : () -> ()
    %cst_71 = arith.constant dense<0.000000e+00> : vector<4x16x32xf32>
    %189 = tpu.matmul %186, %188, %cst_71 {dimension_numbers = #tpu.dot_dimension_numbers<[2], [1], [1], [2], [0, 0, 0, 1, 1, 2], [0], [0]>} : vector<4x16x8xbf16>, vector<4x8x32xbf16>, vector<4x16x32xf32> -> vector<4x16x32xf32>
    "tpu.trace_stop"() : () -> ()
    %cst_72 = arith.constant dense<0.000000e+00> : vector<16x32xf32>
    %190 = vector.multi_reduction <add>, %189, %cst_72 [0] : vector<4x16x32xf32> to vector<16x32xf32>
    %c1_73 = arith.constant 1 : index
    %c0_74 = arith.constant 0 : index
    %c0_75 = arith.constant 0 : index
    %191 = vector.load %arg5[%c1_73, %c0_74, %c0_75] : memref<2x1x32xf32, #tpu.memory_space<vmem>>, vector<1x1x32xf32>
    %192 = vector.shape_cast %191 : vector<1x1x32xf32> to vector<1x32xf32>
    %193 = vector.broadcast %192 : vector<1x32xf32> to vector<16x32xf32>
    %194 = arith.addf %190, %193 : vector<16x32xf32>
    %195 = arith.addf %133, %194 : vector<16x32xf32>
    %cst_76 = arith.constant dense<0.000000e+00> : vector<16xf32>
    %196 = vector.multi_reduction <add>, %195, %cst_76 [1] : vector<16x32xf32> to vector<16xf32>
    %197 = vector.shape_cast %196 : vector<16xf32> to vector<16x1xf32>
    %cst_77 = arith.constant 3.200000e+01 : f32
    %198 = vector.broadcast %cst_77 : f32 to vector<16x1xf32>
    %199 = arith.divf %197, %198 : vector<16x1xf32>
    %200 = vector.broadcast %199 : vector<16x1xf32> to vector<16x32xf32>
    %201 = arith.subf %195, %200 : vector<16x32xf32>
    %202 = arith.mulf %201, %201 : vector<16x32xf32>
    %cst_78 = arith.constant dense<0.000000e+00> : vector<16xf32>
    %203 = vector.multi_reduction <add>, %202, %cst_78 [1] : vector<16x32xf32> to vector<16xf32>
    %204 = vector.shape_cast %203 : vector<16xf32> to vector<16x1xf32>
    %cst_79 = arith.constant 3.200000e+01 : f32
    %205 = vector.broadcast %cst_79 : f32 to vector<16x1xf32>
    %206 = arith.divf %204, %205 : vector<16x1xf32>
    %207 = vector.broadcast %199 : vector<16x1xf32> to vector<16x32xf32>
    %208 = arith.subf %195, %207 : vector<16x32xf32>
    %cst_80 = arith.constant 9.99999974E-6 : f32
    %209 = vector.broadcast %cst_80 : f32 to vector<16x1xf32>
    %210 = arith.addf %206, %209 : vector<16x1xf32>
    %211 = math.rsqrt %210 : vector<16x1xf32>
    %212 = vector.broadcast %211 : vector<16x1xf32> to vector<16x32xf32>
    %213 = arith.mulf %208, %212 : vector<16x32xf32>
    %c1_81 = arith.constant 1 : index
    %c0_82 = arith.constant 0 : index
    %c0_83 = arith.constant 0 : index
    %214 = vector.load %arg6[%c1_81, %c0_82, %c0_83] : memref<2x1x32xf32, #tpu.memory_space<vmem>>, vector<1x1x32xf32>
    %215 = vector.shape_cast %214 : vector<1x1x32xf32> to vector<1x32xf32>
    %216 = vector.broadcast %215 : vector<1x32xf32> to vector<16x32xf32>
    %217 = arith.mulf %213, %216 : vector<16x32xf32>
    %c1_84 = arith.constant 1 : index
    %c0_85 = arith.constant 0 : index
    %c0_86 = arith.constant 0 : index
    %218 = vector.load %arg7[%c1_84, %c0_85, %c0_86] : memref<2x1x32xf32, #tpu.memory_space<vmem>>, vector<1x1x32xf32>
    %219 = vector.shape_cast %218 : vector<1x1x32xf32> to vector<1x32xf32>
    %220 = vector.broadcast %219 : vector<1x32xf32> to vector<16x32xf32>
    %221 = arith.addf %217, %220 : vector<16x32xf32>
    %222 = arith.truncf %221 : vector<16x32xf32> to vector<16x32xbf16>
    %c1_87 = arith.constant 1 : index
    %c0_88 = arith.constant 0 : index
    %c0_89 = arith.constant 0 : index
    %223 = vector.load %arg8[%c1_87, %c0_88, %c0_89] : memref<2x32x512xbf16, #tpu.memory_space<vmem>>, vector<1x32x512xbf16>
    %224 = vector.shape_cast %223 : vector<1x32x512xbf16> to vector<32x512xbf16>
    %cst_90 = arith.constant dense<0.000000e+00> : vector<16x512xf32>
    %225 = tpu.matmul %222, %224, %cst_90 {dimension_numbers = #tpu.dot_dimension_numbers<[1], [0], [0], [1], [0, 0, 1, 1], [], []>} : vector<16x32xbf16>, vector<32x512xbf16>, vector<16x512xf32> -> vector<16x512xf32>
    %c1_91 = arith.constant 1 : index
    %c0_92 = arith.constant 0 : index
    %c0_93 = arith.constant 0 : index
    %226 = vector.load %arg9[%c1_91, %c0_92, %c0_93] : memref<2x1x512xf32, #tpu.memory_space<vmem>>, vector<1x1x512xf32>
    %227 = vector.shape_cast %226 : vector<1x1x512xf32> to vector<1x512xf32>
    %228 = vector.broadcast %227 : vector<1x512xf32> to vector<16x512xf32>
    %229 = arith.addf %225, %228 : vector<16x512xf32>
    %cst_94 = arith.constant 0.000000e+00 : f32
    %230 = vector.broadcast %cst_94 : f32 to vector<16x512xf32>
    %231 = arith.maximumf %229, %230 : vector<16x512xf32>
    %232 = arith.truncf %231 : vector<16x512xf32> to vector<16x512xbf16>
    %c1_95 = arith.constant 1 : index
    %c0_96 = arith.constant 0 : index
    %c0_97 = arith.constant 0 : index
    %233 = vector.load %arg10[%c1_95, %c0_96, %c0_97] : memref<2x512x32xbf16, #tpu.memory_space<vmem>>, vector<1x512x32xbf16>
    %234 = vector.shape_cast %233 : vector<1x512x32xbf16> to vector<512x32xbf16>
    %cst_98 = arith.constant dense<0.000000e+00> : vector<16x32xf32>
    %235 = tpu.matmul %232, %234, %cst_98 {dimension_numbers = #tpu.dot_dimension_numbers<[1], [0], [0], [1], [0, 0, 1, 1], [], []>} : vector<16x512xbf16>, vector<512x32xbf16>, vector<16x32xf32> -> vector<16x32xf32>
    %c1_99 = arith.constant 1 : index
    %c0_100 = arith.constant 0 : index
    %c0_101 = arith.constant 0 : index
    %236 = vector.load %arg11[%c1_99, %c0_100, %c0_101] : memref<2x1x32xf32, #tpu.memory_space<vmem>>, vector<1x1x32xf32>
    %237 = vector.shape_cast %236 : vector<1x1x32xf32> to vector<1x32xf32>
    %238 = vector.broadcast %237 : vector<1x32xf32> to vector<16x32xf32>
    %239 = arith.addf %235, %238 : vector<16x32xf32>
    %240 = arith.addf %221, %239 : vector<16x32xf32>
    %cst_102 = arith.constant dense<0.000000e+00> : vector<16xf32>
    %241 = vector.multi_reduction <add>, %240, %cst_102 [1] : vector<16x32xf32> to vector<16xf32>
    %242 = vector.shape_cast %241 : vector<16xf32> to vector<16x1xf32>
    %cst_103 = arith.constant 3.200000e+01 : f32
    %243 = vector.broadcast %cst_103 : f32 to vector<16x1xf32>
    %244 = arith.divf %242, %243 : vector<16x1xf32>
    %245 = vector.broadcast %244 : vector<16x1xf32> to vector<16x32xf32>
    %246 = arith.subf %240, %245 : vector<16x32xf32>
    %247 = arith.mulf %246, %246 : vector<16x32xf32>
    %cst_104 = arith.constant dense<0.000000e+00> : vector<16xf32>
    %248 = vector.multi_reduction <add>, %247, %cst_104 [1] : vector<16x32xf32> to vector<16xf32>
    %249 = vector.shape_cast %248 : vector<16xf32> to vector<16x1xf32>
    %cst_105 = arith.constant 3.200000e+01 : f32
    %250 = vector.broadcast %cst_105 : f32 to vector<16x1xf32>
    %251 = arith.divf %249, %250 : vector<16x1xf32>
    %252 = vector.broadcast %244 : vector<16x1xf32> to vector<16x32xf32>
    %253 = arith.subf %240, %252 : vector<16x32xf32>
    %cst_106 = arith.constant 9.99999974E-6 : f32
    %254 = vector.broadcast %cst_106 : f32 to vector<16x1xf32>
    %255 = arith.addf %251, %254 : vector<16x1xf32>
    %256 = math.rsqrt %255 : vector<16x1xf32>
    %257 = vector.broadcast %256 : vector<16x1xf32> to vector<16x32xf32>
    %258 = arith.mulf %253, %257 : vector<16x32xf32>
    %c1_107 = arith.constant 1 : index
    %c0_108 = arith.constant 0 : index
    %c0_109 = arith.constant 0 : index
    %259 = vector.load %arg12[%c1_107, %c0_108, %c0_109] : memref<2x1x32xf32, #tpu.memory_space<vmem>>, vector<1x1x32xf32>
    %260 = vector.shape_cast %259 : vector<1x1x32xf32> to vector<1x32xf32>
    %261 = vector.broadcast %260 : vector<1x32xf32> to vector<16x32xf32>
    %262 = arith.mulf %258, %261 : vector<16x32xf32>
    %c1_110 = arith.constant 1 : index
    %c0_111 = arith.constant 0 : index
    %c0_112 = arith.constant 0 : index
    %263 = vector.load %arg13[%c1_110, %c0_111, %c0_112] : memref<2x1x32xf32, #tpu.memory_space<vmem>>, vector<1x1x32xf32>
    %264 = vector.shape_cast %263 : vector<1x1x32xf32> to vector<1x32xf32>
    %265 = vector.broadcast %264 : vector<1x32xf32> to vector<16x32xf32>
    %266 = arith.addf %262, %265 : vector<16x32xf32>
    %c0_113 = arith.constant 0 : index
    %c0_114 = arith.constant 0 : index
    %267 = vector.load %arg14[%c0_113, %c0_114] : memref<16x32xf32, #tpu.memory_space<vmem>>, vector<16x32xf32>
    tpu.vector_store %arg14[%c0_113, %c0_114], %266 {strides = array<i32>} : memref<16x32xf32, #tpu.memory_space<vmem>>, vector<16x32xf32>,
    return
  }
  func.func @transform_0(%arg0: i32) -> (i32, i32) {
    %c0_i32 = arith.constant 0 : i32
    %c0_i32_0 = arith.constant 0 : i32
    %c0_i32_1 = arith.constant 0 : i32
    return %c0_i32, %c0_i32_0 : i32, i32
  }
  func.func @transform_1(%arg0: i32) -> (i32, i32, i32) {
    %c0_i32 = arith.constant 0 : i32
    %c0_i32_0 = arith.constant 0 : i32
    %c0_i32_1 = arith.constant 0 : i32
    %c0_i32_2 = arith.constant 0 : i32
    return %c0_i32, %c0_i32_0, %c0_i32_1 : i32, i32, i32
  }
  func.func @transform_2(%arg0: i32) -> (i32, i32, i32) {
    %c0_i32 = arith.constant 0 : i32
    %c0_i32_0 = arith.constant 0 : i32
    %c0_i32_1 = arith.constant 0 : i32
    %c0_i32_2 = arith.constant 0 : i32
    return %c0_i32, %c0_i32_0, %c0_i32_1 : i32, i32, i32
  }
  func.func @transform_3(%arg0: i32) -> (i32, i32, i32, i32) {
    %c0_i32 = arith.constant 0 : i32
    %c0_i32_0 = arith.constant 0 : i32
    %c0_i32_1 = arith.constant 0 : i32
    %c0_i32_2 = arith.constant 0 : i32
    %c0_i32_3 = arith.constant 0 : i32
    return %c0_i32, %c0_i32_0, %c0_i32_1, %c0_i32_2 : i32, i32, i32, i32
  }
  func.func @transform_4(%arg0: i32) -> (i32, i32, i32) {
    %c0_i32 = arith.constant 0 : i32
    %c0_i32_0 = arith.constant 0 : i32
    %c0_i32_1 = arith.constant 0 : i32
    %c0_i32_2 = arith.constant 0 : i32
    return %c0_i32, %c0_i32_0, %c0_i32_1 : i32, i32, i32
  }
  func.func @transform_5(%arg0: i32) -> (i32, i32, i32) {
    %c0_i32 = arith.constant 0 : i32
    %c0_i32_0 = arith.constant 0 : i32
    %c0_i32_1 = arith.constant 0 : i32
    %c0_i32_2 = arith.constant 0 : i32
    return %c0_i32, %c0_i32_0, %c0_i32_1 : i32, i32, i32
  }
  func.func @transform_6(%arg0: i32) -> (i32, i32, i32) {
    %c0_i32 = arith.constant 0 : i32
    %c0_i32_0 = arith.constant 0 : i32
    %c0_i32_1 = arith.constant 0 : i32
    %c0_i32_2 = arith.constant 0 : i32
    return %c0_i32, %c0_i32_0, %c0_i32_1 : i32, i32, i32
  }
  func.func @transform_7(%arg0: i32) -> (i32, i32, i32) {
    %c0_i32 = arith.constant 0 : i32
    %c0_i32_0 = arith.constant 0 : i32
    %c0_i32_1 = arith.constant 0 : i32
    %c0_i32_2 = arith.constant 0 : i32
    return %c0_i32, %c0_i32_0, %c0_i32_1 : i32, i32, i32
  }
  func.func @transform_8(%arg0: i32) -> (i32, i32, i32) {
    %c0_i32 = arith.constant 0 : i32
    %c0_i32_0 = arith.constant 0 : i32
    %c0_i32_1 = arith.constant 0 : i32
    %c0_i32_2 = arith.constant 0 : i32
    return %c0_i32, %c0_i32_0, %c0_i32_1 : i32, i32, i32
  }
  func.func @transform_9(%arg0: i32) -> (i32, i32, i32) {
    %c0_i32 = arith.constant 0 : i32
    %c0_i32_0 = arith.constant 0 : i32
    %c0_i32_1 = arith.constant 0 : i32
    %c0_i32_2 = arith.constant 0 : i32
    return %c0_i32, %c0_i32_0, %c0_i32_1 : i32, i32, i32
  }
  func.func @transform_10(%arg0: i32) -> (i32, i32, i32) {
    %c0_i32 = arith.constant 0 : i32
    %c0_i32_0 = arith.constant 0 : i32
    %c0_i32_1 = arith.constant 0 : i32
    %c0_i32_2 = arith.constant 0 : i32
    return %c0_i32, %c0_i32_0, %c0_i32_1 : i32, i32, i32
  }
  func.func @transform_11(%arg0: i32) -> (i32, i32, i32) {
    %c0_i32 = arith.constant 0 : i32
    %c0_i32_0 = arith.constant 0 : i32
    %c0_i32_1 = arith.constant 0 : i32
    %c0_i32_2 = arith.constant 0 : i32
    return %c0_i32, %c0_i32_0, %c0_i32_1 : i32, i32, i32
  }
  func.func @transform_12(%arg0: i32) -> (i32, i32, i32) {
    %c0_i32 = arith.constant 0 : i32
    %c0_i32_0 = arith.constant 0 : i32
    %c0_i32_1 = arith.constant 0 : i32
    %c0_i32_2 = arith.constant 0 : i32
    return %c0_i32, %c0_i32_0, %c0_i32_1 : i32, i32, i32
  }
  func.func @transform_13(%arg0: i32) -> (i32, i32) {
    %c0_i32 = arith.constant 0 : i32
    %c0_i32_0 = arith.constant 0 : i32
    %c0_i32_1 = arith.constant 0 : i32
    return %c0_i32, %c0_i32_0 : i32, i32
  }
}

</mosaic_0001>

<llo_original>
// kernel: tpu_custom_call.1
$region0: #{tpu_custom_call.1}
  #allocation0 [shape = 'u32[]', space=smem, size = 0x4, offset = 0x4, fixed_abs, tag = 'smem constant byte address 0x4 - core index']
  #allocation1 [shape = 'u32[72,128]{1,0:T(1,128)}', space=vmem, size = 0x9000, scoped, tag = 'internal scratch']
  %s0 = inlined_call_operand.vmem [shape: f32[16,32], index: 0, kind: input, shape index: {}]
  %s1 = inlined_call_operand.vmem [shape: bf16[2,32,96], index: 1, kind: input, shape index: {}]
  %s2 = inlined_call_operand.vmem [shape: f32[2,1,96], index: 2, kind: input, shape index: {}]
  %s3 = inlined_call_operand.vmem [shape: bf16[2,4,8,32], index: 3, kind: input, shape index: {}]
  %s4 = inlined_call_operand.vmem [shape: f32[2,1,32], index: 4, kind: input, shape index: {}]
  %s5 = inlined_call_operand.vmem [shape: f32[2,1,32], index: 5, kind: input, shape index: {}]
  %s6 = inlined_call_operand.vmem [shape: f32[2,1,32], index: 6, kind: input, shape index: {}]
  %s7 = inlined_call_operand.vmem [shape: bf16[2,32,512], index: 7, kind: input, shape index: {}]
  %s8 = inlined_call_operand.vmem [shape: f32[2,1,512], index: 8, kind: input, shape index: {}]
  %s9 = inlined_call_operand.vmem [shape: bf16[2,512,32], index: 9, kind: input, shape index: {}]
  %s10 = inlined_call_operand.vmem [shape: f32[2,1,32], index: 10, kind: input, shape index: {}]
  %s11 = inlined_call_operand.vmem [shape: f32[2,1,32], index: 11, kind: input, shape index: {}]
  %s12 = inlined_call_operand.vmem [shape: f32[2,1,32], index: 12, kind: input, shape index: {}]
  %s13 = inlined_call_operand.hbm [shape: f32[16,32], index: 13, kind: output, shape index: {}]
  %s14 = sld [smem:[#allocation0]]
  $region62: #{tpu_custom_call.1} parent=0
    _
  %s16 = ssub.s32 1, %s14
  %s17 = scalar_select 0, %s16, %s14
  $region1: #{tpu_custom_call.1} parent=0
    #allocation2 [shape = 'u8[8192]{0}', space=vmem, size = 0x2000, scoped, tag = 'output window, operand 0, single buffered']
    #allocation3 [shape = 's32[1]{0}', space=sflag, size = 0x4, scoped, tag = 'scoped memory for tpu_custom_call.1']
    %18 = vsyncpa [#allocation3], 0
    // Predicated region
    $region2: #{tpu_custom_call.1} parent=1 // pred_check
      _
    $region3: #{tpu_custom_call.1} parent=1 // pred_check_branch
      %20 = sbr.rel (0) target = $region5
    $region4: #{tpu_custom_call.1} parent=1 // pred_region
      _
    $region5: #{tpu_custom_call.1} parent=1 // pred_fallthru
      _
    // Predicated region
    $region6: #{tpu_custom_call.1} parent=1 // pred_check
      _
    $region7: #{tpu_custom_call.1} parent=1 // pred_check_branch
      %22 = sbr.rel (0) target = $region9
    $region8: #{tpu_custom_call.1} parent=1 // pred_region
      _
    $region9: #{tpu_custom_call.1} parent=1 // pred_fallthru
      _
    // Predicated region
    $region10: #{tpu_custom_call.1} parent=1 // pred_check
      _
    $region11: #{tpu_custom_call.1} parent=1 // pred_check_branch
      %24 = sbr.rel (0) target = $region13
    $region12: #{tpu_custom_call.1} parent=1 // pred_region
      _
    $region13: #{tpu_custom_call.1} parent=1 // pred_fallthru
      _
    // Predicated region
    $region14: #{tpu_custom_call.1} parent=1 // pred_check
      _
    $region15: #{tpu_custom_call.1} parent=1 // pred_check_branch
      %26 = sbr.rel (0) target = $region17
    $region16: #{tpu_custom_call.1} parent=1 // pred_region
      _
    $region17: #{tpu_custom_call.1} parent=1 // pred_fallthru
      _
    // Predicated region
    $region18: #{tpu_custom_call.1} parent=1 // pred_check
      _
    $region19: #{tpu_custom_call.1} parent=1 // pred_check_branch
      %28 = sbr.rel (0) target = $region21
    $region20: #{tpu_custom_call.1} parent=1 // pred_region
      _
    $region21: #{tpu_custom_call.1} parent=1 // pred_fallthru
      _
    // Predicated region
    $region22: #{tpu_custom_call.1} parent=1 // pred_check
      _
    $region23: #{tpu_custom_call.1} parent=1 // pred_check_branch
      %30 = sbr.rel (0) target = $region25
    $region24: #{tpu_custom_call.1} parent=1 // pred_region
      _
    $region25: #{tpu_custom_call.1} parent=1 // pred_fallthru
      _
    // Predicated region
    $region26: #{tpu_custom_call.1} parent=1 // pred_check
      _
    $region27: #{tpu_custom_call.1} parent=1 // pred_check_branch
      %32 = sbr.rel (0) target = $region29
    $region28: #{tpu_custom_call.1} parent=1 // pred_region
      _
    $region29: #{tpu_custom_call.1} parent=1 // pred_fallthru
      _
    // Predicated region
    $region30: #{tpu_custom_call.1} parent=1 // pred_check
      _
    $region31: #{tpu_custom_call.1} parent=1 // pred_check_branch
      %34 = sbr.rel (0) target = $region33
    $region32: #{tpu_custom_call.1} parent=1 // pred_region
      _
    $region33: #{tpu_custom_call.1} parent=1 // pred_fallthru
      _
    // Predicated region
    $region34: #{tpu_custom_call.1} parent=1 // pred_check
      _
    $region35: #{tpu_custom_call.1} parent=1 // pred_check_branch
      %36 = sbr.rel (0) target = $region37
    $region36: #{tpu_custom_call.1} parent=1 // pred_region
      _
    $region37: #{tpu_custom_call.1} parent=1 // pred_fallthru
      _
    // Predicated region
    $region38: #{tpu_custom_call.1} parent=1 // pred_check
      _
    $region39: #{tpu_custom_call.1} parent=1 // pred_check_branch
      %38 = sbr.rel (0) target = $region41
    $region40: #{tpu_custom_call.1} parent=1 // pred_region
      _
    $region41: #{tpu_custom_call.1} parent=1 // pred_fallthru
      _
    // Predicated region
    $region42: #{tpu_custom_call.1} parent=1 // pred_check
      _
    $region43: #{tpu_custom_call.1} parent=1 // pred_check_branch
      %40 = sbr.rel (0) target = $region45
    $region44: #{tpu_custom_call.1} parent=1 // pred_region
      _
    $region45: #{tpu_custom_call.1} parent=1 // pred_fallthru
      _
    // Predicated region
    $region46: #{tpu_custom_call.1} parent=1 // pred_check
      _
    $region47: #{tpu_custom_call.1} parent=1 // pred_check_branch
      %42 = sbr.rel (0) target = $region49
    $region48: #{tpu_custom_call.1} parent=1 // pred_region
      _
    $region49: #{tpu_custom_call.1} parent=1 // pred_fallthru
      _
    // Predicated region
    $region50: #{tpu_custom_call.1} parent=1 // pred_check
      _
    $region51: #{tpu_custom_call.1} parent=1 // pred_check_branch
      %44 = sbr.rel (0) target = $region53
    $region52: #{tpu_custom_call.1} parent=1 // pred_region
      _
    $region53: #{tpu_custom_call.1} parent=1 // pred_fallthru
      _
    %v46 = vld [vmem:[%s0] sm:$0xff]
    %v47 = vld [vmem:[%s0 + $0x8] sm:$0xff]
    %v48 = vpack.c.bf16 %v47, %v46
    %v49 = vld [vmem:[%s1] sm:$0xf]
    %v50 = vld [vmem:[%s1 + $0x4] sm:$0xf]
    %v51 = vld [vmem:[%s1 + $0x8] sm:$0xf]
    %v52 = vld [vmem:[%s1 + $0xc] sm:$0xf]
    %v53 = vld [vmem:[%s2] sm:$0x1]
    %v55 = vperm.slane %v53, 0
    %v61 = vunpack.c.l.b16 %v49
    %v62 = vunpack.c.l.b16 %v50
    %v63 = vunpack.c.l.b16 %v51
    %v64 = vunpack.c.l.b16 %v52
    %v65 = vpack.c.b16 %v62, %v61
    %v66 = vpack.c.b16 %v64, %v63
    %vm69 = vcmask 261120
    %v71 = vsel %vm69, %v48, 0
    %73 = vmatpush.bf16.msra.mxu0 0
    %74 = vmatpush.bf16.msra.mxu0 0
    %75 = vmatpush.bf16.msra.mxu0 0
    %76 = vmatpush.bf16.msra.mxu0 0
    %77 = vmatpush.bf16.msra.mxu0 0
    %78 = vmatpush.bf16.msra.mxu0 0
    %79 = vmatpush.bf16.msra.mxu0 %v66
    %80 = vmatpush.bf16.msra.mxu0 %v65
    %81 = vmatmul.bf16.gmra.mxu0 %v71
    %v82 = vpop.f32.mrf.mxu0
    %v83 = vadd.f32 %v55, %v82
    %v84 = vpop.f32.mrf.mxu0
    %v85 = vadd.f32 %v55, %v84
    %86 = vdwg.mxu0
    %89 = vrot.lane.b32.xlu0 %v83, 120
    %v90 = vpop.permute.xlu0 %89
    %91 = vrot.lane.b32.xlu0 %v85, 120
    %v92 = vpop.permute.xlu0 %91
    %95 = vrot.lane.b32.xlu0 %v83, 112
    %v96 = vpop.permute.xlu0 %95
    %97 = vrot.lane.b32.xlu0 %v85, 112
    %v98 = vpop.permute.xlu0 %97
    %101 = vrot.lane.b32.xlu0 %v83, 104
    %v102 = vpop.permute.xlu0 %101
    %103 = vrot.lane.b32.xlu0 %v85, 104
    %v104 = vpop.permute.xlu0 %103
    %v107 = vpack.c.bf16 %v83, %v83
    %v108 = vpack.c.bf16 %v85, %v85
    %v109 = vpack.c.bf16 %v90, %v90
    %v110 = vpack.c.bf16 %v92, %v92
    %v111 = vpack.c.bf16 %v96, %v96
    %v112 = vpack.c.bf16 %v98, %v98
    %v113 = vpack.c.bf16 %v102, %v102
    %v114 = vpack.c.bf16 %v104, %v104
    %v116 = vunpack.c.l.b16 %v107
    %v117 = vpack.c.b16 %v116, %v116
    %118 = vrot.lane.b32.xlu0 %v117, 96
    %v119 = vpop.permute.xlu0 %118
    %vm120 = vcmask 64512
    %v122 = vsel %vm120, %v107, 0
    %v125 = vsel %vm120, %v119, 0
    %127 = vmatpush.bf16.xpose.msra.mxu0 0
    %128 = vmatpush.bf16.xpose.msra.mxu0 0
    %129 = vmatpush.bf16.xpose.msra.mxu0 0
    %130 = vmatpush.bf16.xpose.msra.mxu0 0
    %131 = vmatpush.bf16.xpose.msra.mxu0 0
    %132 = vmatpush.bf16.xpose.msra.mxu0 0
    %133 = vmatpush.bf16.xpose.msra.mxu0 0
    %134 = vmatpush.bf16.xpose.msra.mxu0 %v125
    %135 = vmatmul.bf16.gmra.mxu0 %v122
    %v136 = vpop.f32.mrf.mxu0
    %v137 = vadd.f32 0.0, %v136
    %v138 = vpop.f32.mrf.mxu0
    %139 = vdwg.mxu0
    %v141 = vunpack.c.l.b16 %v108
    %v142 = vpack.c.b16 %v141, %v141
    %143 = vrot.lane.b32.xlu0 %v142, 96
    %v144 = vpop.permute.xlu0 %143
    %v146 = vsel %vm120, %v108, 0
    %v149 = vsel %vm120, %v144, 0
    %151 = vmatpush.bf16.xpose.msra.mxu0 0
    %152 = vmatpush.bf16.xpose.msra.mxu0 0
    %153 = vmatpush.bf16.xpose.msra.mxu0 0
    %154 = vmatpush.bf16.xpose.msra.mxu0 0
    %155 = vmatpush.bf16.xpose.msra.mxu0 0
    %156 = vmatpush.bf16.xpose.msra.mxu0 0
    %157 = vmatpush.bf16.xpose.msra.mxu0 0
    %158 = vmatpush.bf16.xpose.msra.mxu0 %v149
    %159 = vmatmul.bf16.gmra.mxu0 %v146
    %v160 = vpop.f32.mrf.mxu0
    %v161 = vadd.f32 0.0, %v160
    %v162 = vpop.f32.mrf.mxu0
    %163 = vdwg.mxu0
    %v165 = vunpack.c.l.b16 %v109
    %v166 = vpack.c.b16 %v165, %v165
    %167 = vrot.lane.b32.xlu0 %v166, 96
    %v168 = vpop.permute.xlu0 %167
    %v170 = vsel %vm120, %v109, 0
    %v173 = vsel %vm120, %v168, 0
    %175 = vmatpush.bf16.xpose.msra.mxu0 0
    %176 = vmatpush.bf16.xpose.msra.mxu0 0
    %177 = vmatpush.bf16.xpose.msra.mxu0 0
    %178 = vmatpush.bf16.xpose.msra.mxu0 0
    %179 = vmatpush.bf16.xpose.msra.mxu0 0
    %180 = vmatpush.bf16.xpose.msra.mxu0 0
    %181 = vmatpush.bf16.xpose.msra.mxu0 0
    %182 = vmatpush.bf16.xpose.msra.mxu0 %v173
    %183 = vmatmul.bf16.gmra.mxu0 %v170
    %v184 = vpop.f32.mrf.mxu0
    %v185 = vadd.f32 0.0, %v184
    %v186 = vpop.f32.mrf.mxu0
    %187 = vdwg.mxu0
    %v189 = vunpack.c.l.b16 %v110
    %v190 = vpack.c.b16 %v189, %v189
    %191 = vrot.lane.b32.xlu0 %v190, 96
    %v192 = vpop.permute.xlu0 %191
    %v194 = vsel %vm120, %v110, 0
    %v197 = vsel %vm120, %v192, 0
    %199 = vmatpush.bf16.xpose.msra.mxu0 0
    %200 = vmatpush.bf16.xpose.msra.mxu0 0
    %201 = vmatpush.bf16.xpose.msra.mxu0 0
    %202 = vmatpush.bf16.xpose.msra.mxu0 0
    %203 = vmatpush.bf16.xpose.msra.mxu0 0
    %204 = vmatpush.bf16.xpose.msra.mxu0 0
    %205 = vmatpush.bf16.xpose.msra.mxu0 0
    %206 = vmatpush.bf16.xpose.msra.mxu0 %v197
    %207 = vmatmul.bf16.gmra.mxu0 %v194
    %v208 = vpop.f32.mrf.mxu0
    %v209 = vadd.f32 0.0, %v208
    %v210 = vpop.f32.mrf.mxu0
    %211 = vdwg.mxu0
    %v213 = vunpack.c.l.b16 %v111
    %v214 = vpack.c.b16 %v213, %v213
    %215 = vrot.lane.b32.xlu0 %v214, 96
    %v216 = vpop.permute.xlu0 %215
    %v218 = vsel %vm120, %v111, 0
    %v221 = vsel %vm120, %v216, 0
    %223 = vmatpush.bf16.xpose.msra.mxu0 0
    %224 = vmatpush.bf16.xpose.msra.mxu0 0
    %225 = vmatpush.bf16.xpose.msra.mxu0 0
    %226 = vmatpush.bf16.xpose.msra.mxu0 0
    %227 = vmatpush.bf16.xpose.msra.mxu0 0
    %228 = vmatpush.bf16.xpose.msra.mxu0 0
    %229 = vmatpush.bf16.xpose.msra.mxu0 0
    %230 = vmatpush.bf16.xpose.msra.mxu0 %v221
    %231 = vmatmul.bf16.gmra.mxu0 %v218
    %v232 = vpop.f32.mrf.mxu0
    %v233 = vadd.f32 0.0, %v232
    %v234 = vpop.f32.mrf.mxu0
    %235 = vdwg.mxu0
    %v237 = vunpack.c.l.b16 %v112
    %v238 = vpack.c.b16 %v237, %v237
    %239 = vrot.lane.b32.xlu0 %v238, 96
    %v240 = vpop.permute.xlu0 %239
    %v242 = vsel %vm120, %v112, 0
    %v245 = vsel %vm120, %v240, 0
    %247 = vmatpush.bf16.xpose.msra.mxu0 0
    %248 = vmatpush.bf16.xpose.msra.mxu0 0
    %249 = vmatpush.bf16.xpose.msra.mxu0 0
    %250 = vmatpush.bf16.xpose.msra.mxu0 0
    %251 = vmatpush.bf16.xpose.msra.mxu0 0
    %252 = vmatpush.bf16.xpose.msra.mxu0 0
    %253 = vmatpush.bf16.xpose.msra.mxu0 0
    %254 = vmatpush.bf16.xpose.msra.mxu0 %v245
    %255 = vmatmul.bf16.gmra.mxu0 %v242
    %v256 = vpop.f32.mrf.mxu0
    %v257 = vadd.f32 0.0, %v256
    %v258 = vpop.f32.mrf.mxu0
    %259 = vdwg.mxu0
    %v261 = vunpack.c.l.b16 %v113
    %v262 = vpack.c.b16 %v261, %v261
    %263 = vrot.lane.b32.xlu0 %v262, 96
    %v264 = vpop.permute.xlu0 %263
    %v266 = vsel %vm120, %v113, 0
    %v269 = vsel %vm120, %v264, 0
    %271 = vmatpush.bf16.xpose.msra.mxu0 0
    %272 = vmatpush.bf16.xpose.msra.mxu0 0
    %273 = vmatpush.bf16.xpose.msra.mxu0 0
    %274 = vmatpush.bf16.xpose.msra.mxu0 0
    %275 = vmatpush.bf16.xpose.msra.mxu0 0
    %276 = vmatpush.bf16.xpose.msra.mxu0 0
    %277 = vmatpush.bf16.xpose.msra.mxu0 0
    %278 = vmatpush.bf16.xpose.msra.mxu0 %v269
    %279 = vmatmul.bf16.gmra.mxu0 %v266
    %v280 = vpop.f32.mrf.mxu0
    %v281 = vadd.f32 0.0, %v280
    %v282 = vpop.f32.mrf.mxu0
    %283 = vdwg.mxu0
    %v285 = vunpack.c.l.b16 %v114
    %v286 = vpack.c.b16 %v285, %v285
    %287 = vrot.lane.b32.xlu0 %v286, 96
    %v288 = vpop.permute.xlu0 %287
    %v290 = vsel %vm120, %v114, 0
    %v293 = vsel %vm120, %v288, 0
    %295 = vmatpush.bf16.xpose.msra.mxu0 0
    %296 = vmatpush.bf16.xpose.msra.mxu0 0
    %297 = vmatpush.bf16.xpose.msra.mxu0 0
    %298 = vmatpush.bf16.xpose.msra.mxu0 0
    %299 = vmatpush.bf16.xpose.msra.mxu0 0
    %300 = vmatpush.bf16.xpose.msra.mxu0 0
    %301 = vmatpush.bf16.xpose.msra.mxu0 0
    %302 = vmatpush.bf16.xpose.msra.mxu0 %v293
    %303 = vmatmul.bf16.gmra.mxu0 %v290
    %v304 = vpop.f32.mrf.mxu0
    %v305 = vadd.f32 0.0, %v304
    %v306 = vpop.f32.mrf.mxu0
    %307 = vdwg.mxu0
    %v308 = vsel %vm120, %v137, -inf
    %309 = vmax.xlane.f32.xlu0 %v308
    %v310 = vpop.xlane.xlu0 %309
    %v311 = vsel %vm120, %v161, -inf
    %312 = vmax.xlane.f32.xlu0 %v311
    %v313 = vpop.xlane.xlu0 %312
    %v314 = vsel %vm120, %v185, -inf
    %315 = vmax.xlane.f32.xlu0 %v314
    %v316 = vpop.xlane.xlu0 %315
    %v317 = vsel %vm120, %v209, -inf
    %318 = vmax.xlane.f32.xlu0 %v317
    %v319 = vpop.xlane.xlu0 %318
    %v320 = vsel %vm120, %v233, -inf
    %321 = vmax.xlane.f32.xlu0 %v320
    %v322 = vpop.xlane.xlu0 %321
    %v323 = vsel %vm120, %v257, -inf
    %324 = vmax.xlane.f32.xlu0 %v323
    %v325 = vpop.xlane.xlu0 %324
    %v326 = vsel %vm120, %v281, -inf
    %327 = vmax.xlane.f32.xlu0 %v326
    %v328 = vpop.xlane.xlu0 %327
    %v329 = vsel %vm120, %v305, -inf
    %330 = vmax.xlane.f32.xlu0 %v329
    %v331 = vpop.xlane.xlu0 %330
    %v332 = vsub.f32 %v137, %v310
    %v333 = vsub.f32 %v161, %v313
    %v334 = vsub.f32 %v185, %v316
    %v335 = vsub.f32 %v209, %v319
    %v336 = vsub.f32 %v233, %v322
    %v337 = vsub.f32 %v257, %v325
    %v338 = vsub.f32 %v281, %v328
    %v339 = vsub.f32 %v305, %v331
    %v340 = vmul.f32 %v332, 1.442695
    %v341 = vpow.pop %v340
    %v342 = vmul.f32 %v333, 1.442695
    %v343 = vpow.pop %v342
    %v344 = vmul.f32 %v334, 1.442695
    %v345 = vpow.pop %v344
    %v346 = vmul.f32 %v335, 1.442695
    %v347 = vpow.pop %v346
    %v348 = vmul.f32 %v336, 1.442695
    %v349 = vpow.pop %v348
    %v350 = vmul.f32 %v337, 1.442695
    %v351 = vpow.pop %v350
    %v352 = vmul.f32 %v338, 1.442695
    %v353 = vpow.pop %v352
    %v354 = vmul.f32 %v339, 1.442695
    %v355 = vpow.pop %v354
    %v356 = vsel %vm120, %v341, 0.0
    %357 = vadd.xlane.f32.xlu0 %v356
    %v358 = vpop.xlane.xlu0 %357
    %v359 = vsel %vm120, %v343, 0.0
    %360 = vadd.xlane.f32.xlu0 %v359
    %v361 = vpop.xlane.xlu0 %360
    %v362 = vsel %vm120, %v345, 0.0
    %363 = vadd.xlane.f32.xlu0 %v362
    %v364 = vpop.xlane.xlu0 %363
    %v365 = vsel %vm120, %v347, 0.0
    %366 = vadd.xlane.f32.xlu0 %v365
    %v367 = vpop.xlane.xlu0 %366
    %v368 = vsel %vm120, %v349, 0.0
    %369 = vadd.xlane.f32.xlu0 %v368
    %v370 = vpop.xlane.xlu0 %369
    %v371 = vsel %vm120, %v351, 0.0
    %372 = vadd.xlane.f32.xlu0 %v371
    %v373 = vpop.xlane.xlu0 %372
    %v374 = vsel %vm120, %v353, 0.0
    %375 = vadd.xlane.f32.xlu0 %v374
    %v376 = vpop.xlane.xlu0 %375
    %v377 = vsel %vm120, %v355, 0.0
    %378 = vadd.xlane.f32.xlu0 %v377
    %v379 = vpop.xlane.xlu0 %378
    %v380 = vrcp.pop %v358
    %v381 = vrcp.pop %v361
    %v382 = vrcp.pop %v364
    %v383 = vrcp.pop %v367
    %v384 = vrcp.pop %v370
    %v385 = vrcp.pop %v373
    %v386 = vrcp.pop %v376
    %v387 = vrcp.pop %v379
    %v388 = vmul.f32 %v341, %v380
    %v389 = vmul.f32 %v343, %v381
    %v390 = vmul.f32 %v345, %v382
    %v391 = vmul.f32 %v347, %v383
    %v392 = vmul.f32 %v349, %v384
    %v393 = vmul.f32 %v351, %v385
    %v394 = vmul.f32 %v353, %v386
    %v395 = vmul.f32 %v355, %v387
    %v396 = vpack.c.bf16 %v388, %v388
    %v397 = vpack.c.bf16 %v389, %v389
    %v398 = vpack.c.bf16 %v390, %v390
    %v399 = vpack.c.bf16 %v391, %v391
    %v400 = vpack.c.bf16 %v392, %v392
    %v401 = vpack.c.bf16 %v393, %v393
    %v402 = vpack.c.bf16 %v394, %v394
    %v403 = vpack.c.bf16 %v395, %v395
    %404 = vrot.lane.b32.xlu0 %v117, 64
    %v405 = vpop.permute.xlu0 %404
    %v407 = vsel %vm120, %v396, 0
    %vm409 = vcmask 1043456
    %v411 = vsel %vm409, %v405, 0
    %413 = vmatpush.bf16.msra.mxu0 0
    %414 = vmatpush.bf16.msra.mxu0 0
    %415 = vmatpush.bf16.msra.mxu0 0
    %416 = vmatpush.bf16.msra.mxu0 0
    %417 = vmatpush.bf16.msra.mxu0 0
    %418 = vmatpush.bf16.msra.mxu0 0
    %419 = vmatpush.bf16.msra.mxu0 0
    %420 = vmatpush.bf16.msra.mxu0 %v411
    %421 = vmatmul.bf16.gmra.mxu0 %v407
    %v422 = vpop.f32.mrf.mxu0
    %v423 = vadd.f32 0.0, %v422
    %v424 = vpop.f32.mrf.mxu0
    %425 = vdwg.mxu0
    %426 = vrot.lane.b32.xlu0 %v142, 64
    %v427 = vpop.permute.xlu0 %426
    %v429 = vsel %vm120, %v397, 0
    %v432 = vsel %vm409, %v427, 0
    %434 = vmatpush.bf16.msra.mxu0 0
    %435 = vmatpush.bf16.msra.mxu0 0
    %436 = vmatpush.bf16.msra.mxu0 0
    %437 = vmatpush.bf16.msra.mxu0 0
    %438 = vmatpush.bf16.msra.mxu0 0
    %439 = vmatpush.bf16.msra.mxu0 0
    %440 = vmatpush.bf16.msra.mxu0 0
    %441 = vmatpush.bf16.msra.mxu0 %v432
    %442 = vmatmul.bf16.gmra.mxu0 %v429
    %v443 = vpop.f32.mrf.mxu0
    %v444 = vadd.f32 0.0, %v443
    %v445 = vpop.f32.mrf.mxu0
    %446 = vdwg.mxu0
    %447 = vrot.lane.b32.xlu0 %v166, 64
    %v448 = vpop.permute.xlu0 %447
    %v450 = vsel %vm120, %v398, 0
    %v453 = vsel %vm409, %v448, 0
    %455 = vmatpush.bf16.msra.mxu0 0
    %456 = vmatpush.bf16.msra.mxu0 0
    %457 = vmatpush.bf16.msra.mxu0 0
    %458 = vmatpush.bf16.msra.mxu0 0
    %459 = vmatpush.bf16.msra.mxu0 0
    %460 = vmatpush.bf16.msra.mxu0 0
    %461 = vmatpush.bf16.msra.mxu0 0
    %462 = vmatpush.bf16.msra.mxu0 %v453
    %463 = vmatmul.bf16.gmra.mxu0 %v450
    %v464 = vpop.f32.mrf.mxu0
    %v465 = vadd.f32 0.0, %v464
    %v466 = vpop.f32.mrf.mxu0
    %467 = vdwg.mxu0
    %468 = vrot.lane.b32.xlu0 %v190, 64
    %v469 = vpop.permute.xlu0 %468
    %v471 = vsel %vm120, %v399, 0
    %v474 = vsel %vm409, %v469, 0
    %476 = vmatpush.bf16.msra.mxu0 0
    %477 = vmatpush.bf16.msra.mxu0 0
    %478 = vmatpush.bf16.msra.mxu0 0
    %479 = vmatpush.bf16.msra.mxu0 0
    %480 = vmatpush.bf16.msra.mxu0 0
    %481 = vmatpush.bf16.msra.mxu0 0
    %482 = vmatpush.bf16.msra.mxu0 0
    %483 = vmatpush.bf16.msra.mxu0 %v474
    %484 = vmatmul.bf16.gmra.mxu0 %v471
    %v485 = vpop.f32.mrf.mxu0
    %v486 = vadd.f32 0.0, %v485
    %v487 = vpop.f32.mrf.mxu0
    %488 = vdwg.mxu0
    %489 = vrot.lane.b32.xlu0 %v214, 64
    %v490 = vpop.permute.xlu0 %489
    %v492 = vsel %vm120, %v400, 0
    %v495 = vsel %vm409, %v490, 0
    %497 = vmatpush.bf16.msra.mxu0 0
    %498 = vmatpush.bf16.msra.mxu0 0
    %499 = vmatpush.bf16.msra.mxu0 0
    %500 = vmatpush.bf16.msra.mxu0 0
    %501 = vmatpush.bf16.msra.mxu0 0
    %502 = vmatpush.bf16.msra.mxu0 0
    %503 = vmatpush.bf16.msra.mxu0 0
    %504 = vmatpush.bf16.msra.mxu0 %v495
    %505 = vmatmul.bf16.gmra.mxu0 %v492
    %v506 = vpop.f32.mrf.mxu0
    %v507 = vadd.f32 0.0, %v506
    %v508 = vpop.f32.mrf.mxu0
    %509 = vdwg.mxu0
    %510 = vrot.lane.b32.xlu0 %v238, 64
    %v511 = vpop.permute.xlu0 %510
    %v513 = vsel %vm120, %v401, 0
    %v516 = vsel %vm409, %v511, 0
    %518 = vmatpush.bf16.msra.mxu0 0
    %519 = vmatpush.bf16.msra.mxu0 0
    %520 = vmatpush.bf16.msra.mxu0 0
    %521 = vmatpush.bf16.msra.mxu0 0
    %522 = vmatpush.bf16.msra.mxu0 0
    %523 = vmatpush.bf16.msra.mxu0 0
    %524 = vmatpush.bf16.msra.mxu0 0
    %525 = vmatpush.bf16.msra.mxu0 %v516
    %526 = vmatmul.bf16.gmra.mxu0 %v513
    %v527 = vpop.f32.mrf.mxu0
    %v528 = vadd.f32 0.0, %v527
    %v529 = vpop.f32.mrf.mxu0
    %530 = vdwg.mxu0
    %531 = vrot.lane.b32.xlu0 %v262, 64
    %v532 = vpop.permute.xlu0 %531
    %v534 = vsel %vm120, %v402, 0
    %v537 = vsel %vm409, %v532, 0
    %539 = vmatpush.bf16.msra.mxu0 0
    %540 = vmatpush.bf16.msra.mxu0 0
    %541 = vmatpush.bf16.msra.mxu0 0
    %542 = vmatpush.bf16.msra.mxu0 0
    %543 = vmatpush.bf16.msra.mxu0 0
    %544 = vmatpush.bf16.msra.mxu0 0
    %545 = vmatpush.bf16.msra.mxu0 0
    %546 = vmatpush.bf16.msra.mxu0 %v537
    %547 = vmatmul.bf16.gmra.mxu0 %v534
    %v548 = vpop.f32.mrf.mxu0
    %v549 = vadd.f32 0.0, %v548
    %v550 = vpop.f32.mrf.mxu0
    %551 = vdwg.mxu0
    %552 = vrot.lane.b32.xlu0 %v286, 64
    %v553 = vpop.permute.xlu0 %552
    %v555 = vsel %vm120, %v403, 0
    %v558 = vsel %vm409, %v553, 0
    %560 = vmatpush.bf16.msra.mxu0 0
    %561 = vmatpush.bf16.msra.mxu0 0
    %562 = vmatpush.bf16.msra.mxu0 0
    %563 = vmatpush.bf16.msra.mxu0 0
    %564 = vmatpush.bf16.msra.mxu0 0
    %565 = vmatpush.bf16.msra.mxu0 0
    %566 = vmatpush.bf16.msra.mxu0 0
    %567 = vmatpush.bf16.msra.mxu0 %v558
    %568 = vmatmul.bf16.gmra.mxu0 %v555
    %v569 = vpop.f32.mrf.mxu0
    %v570 = vadd.f32 0.0, %v569
    %v571 = vpop.f32.mrf.mxu0
    %572 = vdwg.mxu0
    %v573 = vpack.c.bf16 %v423, %v423
    %v574 = vpack.c.bf16 %v444, %v444
    %v575 = vpack.c.bf16 %v465, %v465
    %v576 = vpack.c.bf16 %v486, %v486
    %v577 = vpack.c.bf16 %v507, %v507
    %v578 = vpack.c.bf16 %v528, %v528
    %v579 = vpack.c.bf16 %v549, %v549
    %v580 = vpack.c.bf16 %v570, %v570
    %v581 = vld [vmem:[%s3] sm:$0xf]
    %v582 = vld [vmem:[%s3 + $0x4] sm:$0xf]
    %v583 = vld [vmem:[%s3 + $0x8] sm:$0xf]
    %v584 = vld [vmem:[%s3 + $0xc] sm:$0xf]
    %v587 = vunpack.c.l.b16 %v573
    %v588 = vunpack.c.l.b16 %v574
    %v589 = vpack.c.b16 %v588, %v587
    %v591 = vsel %vm120, %v589, 0
    %v594 = vsel %vm409, %v581, 0
    %596 = vmatpush.bf16.msra.mxu0 0
    %597 = vmatpush.bf16.msra.mxu0 0
    %598 = vmatpush.bf16.msra.mxu0 0
    %599 = vmatpush.bf16.msra.mxu0 0
    %600 = vmatpush.bf16.msra.mxu0 0
    %601 = vmatpush.bf16.msra.mxu0 0
    %602 = vmatpush.bf16.msra.mxu0 0
    %603 = vmatpush.bf16.msra.mxu0 %v594
    %604 = vmatmul.bf16.gmra.mxu0 %v591
    %v605 = vpop.f32.mrf.mxu0
    %v606 = vadd.f32 0.0, %v605
    %v607 = vpop.f32.mrf.mxu0
    %v608 = vadd.f32 0.0, %v607
    %609 = vdwg.mxu0
    %v612 = vunpack.c.l.b16 %v575
    %v613 = vunpack.c.l.b16 %v576
    %v614 = vpack.c.b16 %v613, %v612
    %v616 = vsel %vm120, %v614, 0
    %v619 = vsel %vm409, %v582, 0
    %621 = vmatpush.bf16.msra.mxu0 0
    %622 = vmatpush.bf16.msra.mxu0 0
    %623 = vmatpush.bf16.msra.mxu0 0
    %624 = vmatpush.bf16.msra.mxu0 0
    %625 = vmatpush.bf16.msra.mxu0 0
    %626 = vmatpush.bf16.msra.mxu0 0
    %627 = vmatpush.bf16.msra.mxu0 0
    %628 = vmatpush.bf16.msra.mxu0 %v619
    %629 = vmatmul.bf16.gmra.mxu0 %v616
    %v630 = vpop.f32.mrf.mxu0
    %v631 = vadd.f32 0.0, %v630
    %v632 = vpop.f32.mrf.mxu0
    %v633 = vadd.f32 0.0, %v632
    %634 = vdwg.mxu0
    %v637 = vunpack.c.l.b16 %v577
    %v638 = vunpack.c.l.b16 %v578
    %v639 = vpack.c.b16 %v638, %v637
    %v641 = vsel %vm120, %v639, 0
    %v644 = vsel %vm409, %v583, 0
    %646 = vmatpush.bf16.msra.mxu0 0
    %647 = vmatpush.bf16.msra.mxu0 0
    %648 = vmatpush.bf16.msra.mxu0 0
    %649 = vmatpush.bf16.msra.mxu0 0
    %650 = vmatpush.bf16.msra.mxu0 0
    %651 = vmatpush.bf16.msra.mxu0 0
    %652 = vmatpush.bf16.msra.mxu0 0
    %653 = vmatpush.bf16.msra.mxu0 %v644
    %654 = vmatmul.bf16.gmra.mxu0 %v641
    %v655 = vpop.f32.mrf.mxu0
    %v656 = vadd.f32 0.0, %v655
    %v657 = vpop.f32.mrf.mxu0
    %v658 = vadd.f32 0.0, %v657
    %659 = vdwg.mxu0
    %v662 = vunpack.c.l.b16 %v579
    %v663 = vunpack.c.l.b16 %v580
    %v664 = vpack.c.b16 %v663, %v662
    %v666 = vsel %vm120, %v664, 0
    %v669 = vsel %vm409, %v584, 0
    %671 = vmatpush.bf16.msra.mxu0 0
    %672 = vmatpush.bf16.msra.mxu0 0
    %673 = vmatpush.bf16.msra.mxu0 0
    %674 = vmatpush.bf16.msra.mxu0 0
    %675 = vmatpush.bf16.msra.mxu0 0
    %676 = vmatpush.bf16.msra.mxu0 0
    %677 = vmatpush.bf16.msra.mxu0 0
    %678 = vmatpush.bf16.msra.mxu0 %v669
    %679 = vmatmul.bf16.gmra.mxu0 %v666
    %v680 = vpop.f32.mrf.mxu0
    %v681 = vadd.f32 0.0, %v680
    %v682 = vpop.f32.mrf.mxu0
    %v683 = vadd.f32 0.0, %v682
    %684 = vdwg.mxu0
    %v685 = vsel %vm69, %v606, 0.0
    %v686 = vsel %vm69, %v631, 0.0
    %v687 = vadd.f32 %v685, %v686
    %v688 = vsel %vm69, %v656, 0.0
    %v689 = vadd.f32 %v687, %v688
    %v690 = vsel %vm69, %v681, 0.0
    %v691 = vadd.f32 %v689, %v690
    %v692 = vsel %vm69, %v608, 0.0
    %v693 = vsel %vm69, %v633, 0.0
    %v694 = vadd.f32 %v692, %v693
    %v695 = vsel %vm69, %v658, 0.0
    %v696 = vadd.f32 %v694, %v695
    %v697 = vsel %vm69, %v683, 0.0
    %v698 = vadd.f32 %v696, %v697
    %v699 = vld [vmem:[%s4] sm:$0x1]
    %v701 = vperm.slane %v699, 0
    %v703 = vadd.f32 %v691, %v701
    %v704 = vadd.f32 %v698, %v701
    %v705 = vadd.f32 %v46, %v703
    %v706 = vadd.f32 %v47, %v704
    %v707 = vsel %vm69, %v705, 0.0
    %708 = vadd.xlane.f32.xlu0 %v707
    %v709 = vpop.xlane.xlu0 %708
    %v710 = vsel %vm69, %v706, 0.0
    %711 = vadd.xlane.f32.xlu0 %v710
    %v712 = vpop.xlane.xlu0 %711
    %v713 = vrcp.pop 32.0
    %v714 = vmul.f32 32.0, %v713
    %v715 = vsub.f32 1.0, %v714
    %v716 = vmul.f32 %v713, %v715
    %v717 = vadd.f32 %v713, %v716
    %vm718 = vweird.f32 %v713
    %v719 = vsel %vm718, %v713, %v717
    %v720 = vmul.f32 %v709, %v719
    %v721 = vmul.f32 %v712, %v719
    %v722 = vsub.f32 %v705, %v720
    %v723 = vsub.f32 %v706, %v721
    %v724 = vmul.f32 %v722, %v722
    %v725 = vmul.f32 %v723, %v723
    %v726 = vsel %vm69, %v724, 0.0
    %727 = vadd.xlane.f32.xlu0 %v726
    %v728 = vpop.xlane.xlu0 %727
    %v729 = vsel %vm69, %v725, 0.0
    %730 = vadd.xlane.f32.xlu0 %v729
    %v731 = vpop.xlane.xlu0 %730
    %v732 = vmul.f32 %v728, %v719
    %v733 = vmul.f32 %v731, %v719
    %v734 = vadd.f32 %v732, 1e-05
    %v735 = vadd.f32 %v733, 1e-05
    %v736 = vrsqrt.pop %v734
    %v737 = vmul.f32 %v736, %v734
    %v738 = vmul.f32 %v737, %v736
    %v739 = vmul.f32 0.5, %v738
    %v740 = vsub.f32 1.5, %v739
    %v741 = vmul.f32 %v736, %v740
    %vm742 = vweird.f32 %v734
    %vm743 = vweird.f32 %v736
    %vm744 = vmor %vm742, %vm743
    %v745 = vsel %vm744, %v736, %v741
    %v746 = vrsqrt.pop %v735
    %v747 = vmul.f32 %v746, %v735
    %v748 = vmul.f32 %v747, %v746
    %v749 = vmul.f32 0.5, %v748
    %v750 = vsub.f32 1.5, %v749
    %v751 = vmul.f32 %v746, %v750
    %vm752 = vweird.f32 %v735
    %vm753 = vweird.f32 %v746
    %vm754 = vmor %vm752, %vm753
    %v755 = vsel %vm754, %v746, %v751
    %v756 = vmul.f32 %v722, %v745
    %v757 = vmul.f32 %v723, %v755
    %v758 = vld [vmem:[%s5] sm:$0x1]
    %v760 = vperm.slane %v758, 0
    %v762 = vmul.f32 %v756, %v760
    %v763 = vmul.f32 %v757, %v760
    %v764 = vld [vmem:[%s6] sm:$0x1]
    %v766 = vperm.slane %v764, 0
    %v768 = vadd.f32 %v762, %v766
    %v769 = vadd.f32 %v763, %v766
    %v770 = vpack.c.bf16 %v769, %v768
    %v771 = vld [vmem:[%s7] sm:$0xff]
    %v772 = vld [vmem:[%s7 + $0x8] sm:$0xff]
    %v773 = vld [vmem:[%s7 + $0x10] sm:$0xff]
    %v774 = vld [vmem:[%s7 + $0x18] sm:$0xff]
    %v775 = vld [vmem:[%s7 + $0x20] sm:$0xff]
    %v776 = vld [vmem:[%s7 + $0x28] sm:$0xff]
    %v777 = vld [vmem:[%s7 + $0x30] sm:$0xff]
    %v778 = vld [vmem:[%s7 + $0x38] sm:$0xff]
    %v779 = vld [vmem:[%s8] sm:$0xf]
    %v781 = vperm.slane %v779, 0
    %v782 = vperm.slane %v779, 1
    %v783 = vperm.slane %v779, 2
    %v784 = vperm.slane %v779, 3
    %v797 = vunpack.c.l.b16 %v771
    %v798 = vunpack.c.h.b16 %v771
    %v799 = vunpack.c.l.b16 %v772
    %v800 = vunpack.c.h.b16 %v772
    %v801 = vunpack.c.l.b16 %v773
    %v802 = vunpack.c.h.b16 %v773
    %v803 = vunpack.c.l.b16 %v774
    %v804 = vunpack.c.h.b16 %v774
    %v805 = vunpack.c.l.b16 %v775
    %v806 = vunpack.c.h.b16 %v775
    %v807 = vunpack.c.l.b16 %v776
    %v808 = vunpack.c.h.b16 %v776
    %v809 = vunpack.c.l.b16 %v777
    %v810 = vunpack.c.h.b16 %v777
    %v811 = vunpack.c.l.b16 %v778
    %v812 = vunpack.c.h.b16 %v778
    %v813 = vpack.c.b16 %v801, %v797
    %v814 = vpack.c.b16 %v802, %v798
    %v815 = vpack.c.b16 %v803, %v799
    %v816 = vpack.c.b16 %v804, %v800
    %v817 = vpack.c.b16 %v809, %v805
    %v818 = vpack.c.b16 %v810, %v806
    %v819 = vpack.c.b16 %v811, %v807
    %v820 = vpack.c.b16 %v812, %v808
    %v830 = vsel %vm69, %v770, 0
    %832 = vmatpush.bf16.msra.mxu0 0
    %833 = vmatpush.bf16.msra.mxu0 0
    %834 = vmatpush.bf16.msra.mxu0 0
    %835 = vmatpush.bf16.msra.mxu0 0
    %836 = vmatpush.bf16.msra.mxu0 0
    %837 = vmatpush.bf16.msra.mxu0 0
    %838 = vmatpush.bf16.msra.mxu0 %v817
    %839 = vmatpush.bf16.msra.mxu0 %v813
    %840 = vmatmul.bf16.gmra.mxu0 %v830
    %v841 = vpop.f32.mrf.mxu0
    %v842 = vadd.f32 %v781, %v841
    %v843 = vpop.f32.mrf.mxu0
    %v844 = vadd.f32 %v781, %v843
    %845 = vdwg.mxu0
    %846 = vmatpush.bf16.msra.mxu0 0
    %847 = vmatpush.bf16.msra.mxu0 0
    %848 = vmatpush.bf16.msra.mxu0 0
    %849 = vmatpush.bf16.msra.mxu0 0
    %850 = vmatpush.bf16.msra.mxu0 0
    %851 = vmatpush.bf16.msra.mxu0 0
    %852 = vmatpush.bf16.msra.mxu0 %v818
    %853 = vmatpush.bf16.msra.mxu0 %v814
    %854 = vmatmul.bf16.gmra.mxu0 %v830
    %v855 = vpop.f32.mrf.mxu0
    %v856 = vadd.f32 %v782, %v855
    %v857 = vpop.f32.mrf.mxu0
    %v858 = vadd.f32 %v782, %v857
    %859 = vdwg.mxu0
    %860 = vmatpush.bf16.msra.mxu0 0
    %861 = vmatpush.bf16.msra.mxu0 0
    %862 = vmatpush.bf16.msra.mxu0 0
    %863 = vmatpush.bf16.msra.mxu0 0
    %864 = vmatpush.bf16.msra.mxu0 0
    %865 = vmatpush.bf16.msra.mxu0 0
    %866 = vmatpush.bf16.msra.mxu0 %v819
    %867 = vmatpush.bf16.msra.mxu0 %v815
    %868 = vmatmul.bf16.gmra.mxu0 %v830
    %v869 = vpop.f32.mrf.mxu0
    %v870 = vadd.f32 %v783, %v869
    %v871 = vpop.f32.mrf.mxu0
    %v872 = vadd.f32 %v783, %v871
    %873 = vdwg.mxu0
    %874 = vmatpush.bf16.msra.mxu0 0
    %875 = vmatpush.bf16.msra.mxu0 0
    %876 = vmatpush.bf16.msra.mxu0 0
    %877 = vmatpush.bf16.msra.mxu0 0
    %878 = vmatpush.bf16.msra.mxu0 0
    %879 = vmatpush.bf16.msra.mxu0 0
    %880 = vmatpush.bf16.msra.mxu0 %v820
    %881 = vmatpush.bf16.msra.mxu0 %v816
    %882 = vmatmul.bf16.gmra.mxu0 %v830
    %v883 = vpop.f32.mrf.mxu0
    %v884 = vadd.f32 %v784, %v883
    %v885 = vpop.f32.mrf.mxu0
    %v886 = vadd.f32 %v784, %v885
    %887 = vdwg.mxu0
    %v888 = vmax.f32 %v842, 0.0
    %v889 = vmax.f32 %v856, 0.0
    %v890 = vmax.f32 %v870, 0.0
    %v891 = vmax.f32 %v884, 0.0
    %v892 = vmax.f32 %v844, 0.0
    %v893 = vmax.f32 %v858, 0.0
    %v894 = vmax.f32 %v872, 0.0
    %v895 = vmax.f32 %v886, 0.0
    %v896 = vpack.c.bf16 %v892, %v888
    %v897 = vpack.c.bf16 %v893, %v889
    %v898 = vpack.c.bf16 %v894, %v890
    %v899 = vpack.c.bf16 %v895, %v891
    %v900 = vld [vmem:[%s9] sm:$0xf]
    %v901 = vld [vmem:[%s9 + $0x4] sm:$0xf]
    %v902 = vld [vmem:[%s9 + $0x8] sm:$0xf]
    %v903 = vld [vmem:[%s9 + $0xc] sm:$0xf]
    %v904 = vld [vmem:[%s9 + $0x10] sm:$0xf]
    %v905 = vld [vmem:[%s9 + $0x14] sm:$0xf]
    %v906 = vld [vmem:[%s9 + $0x18] sm:$0xf]
    %v907 = vld [vmem:[%s9 + $0x1c] sm:$0xf]
    %v908 = vld [vmem:[%s9 + $0x20] sm:$0xf]
    %v909 = vld [vmem:[%s9 + $0x24] sm:$0xf]
    %v910 = vld [vmem:[%s9 + $0x28] sm:$0xf]
    %v911 = vld [vmem:[%s9 + $0x2c] sm:$0xf]
    %v912 = vld [vmem:[%s9 + $0x30] sm:$0xf]
    %v913 = vld [vmem:[%s9 + $0x34] sm:$0xf]
    %v914 = vld [vmem:[%s9 + $0x38] sm:$0xf]
    %v915 = vld [vmem:[%s9 + $0x3c] sm:$0xf]
    %v916 = vld [vmem:[%s9 + $0x40] sm:$0xf]
    %v917 = vld [vmem:[%s9 + $0x44] sm:$0xf]
    %v918 = vld [vmem:[%s9 + $0x48] sm:$0xf]
    %v919 = vld [vmem:[%s9 + $0x4c] sm:$0xf]
    %v920 = vld [vmem:[%s9 + $0x50] sm:$0xf]
    %v921 = vld [vmem:[%s9 + $0x54] sm:$0xf]
    %v922 = vld [vmem:[%s9 + $0x58] sm:$0xf]
    %v923 = vld [vmem:[%s9 + $0x5c] sm:$0xf]
    %v924 = vld [vmem:[%s9 + $0x60] sm:$0xf]
    %v925 = vld [vmem:[%s9 + $0x64] sm:$0xf]
    %v926 = vld [vmem:[%s9 + $0x68] sm:$0xf]
    %v927 = vld [vmem:[%s9 + $0x6c] sm:$0xf]
    %v928 = vld [vmem:[%s9 + $0x70] sm:$0xf]
    %v929 = vld [vmem:[%s9 + $0x74] sm:$0xf]
    %v930 = vld [vmem:[%s9 + $0x78] sm:$0xf]
    %v931 = vld [vmem:[%s9 + $0x7c] sm:$0xf]
    %v932 = vld [vmem:[%s9 + $0x80] sm:$0xf]
    %v933 = vld [vmem:[%s9 + $0x84] sm:$0xf]
    %v934 = vld [vmem:[%s9 + $0x88] sm:$0xf]
    %v935 = vld [vmem:[%s9 + $0x8c] sm:$0xf]
    %v936 = vld [vmem:[%s9 + $0x90] sm:$0xf]
    %v937 = vld [vmem:[%s9 + $0x94] sm:$0xf]
    %v938 = vld [vmem:[%s9 + $0x98] sm:$0xf]
    %v939 = vld [vmem:[%s9 + $0x9c] sm:$0xf]
    %v940 = vld [vmem:[%s9 + $0xa0] sm:$0xf]
    %v941 = vld [vmem:[%s9 + $0xa4] sm:$0xf]
    %v942 = vld [vmem:[%s9 + $0xa8] sm:$0xf]
    %v943 = vld [vmem:[%s9 + $0xac] sm:$0xf]
    %v944 = vld [vmem:[%s9 + $0xb0] sm:$0xf]
    %v945 = vld [vmem:[%s9 + $0xb4] sm:$0xf]
    %v946 = vld [vmem:[%s9 + $0xb8] sm:$0xf]
    %v947 = vld [vmem:[%s9 + $0xbc] sm:$0xf]
    %v948 = vld [vmem:[%s9 + $0xc0] sm:$0xf]
    %v949 = vld [vmem:[%s9 + $0xc4] sm:$0xf]
    %v950 = vld [vmem:[%s9 + $0xc8] sm:$0xf]
    %v951 = vld [vmem:[%s9 + $0xcc] sm:$0xf]
    %v952 = vld [vmem:[%s9 + $0xd0] sm:$0xf]
    %v953 = vld [vmem:[%s9 + $0xd4] sm:$0xf]
    %v954 = vld [vmem:[%s9 + $0xd8] sm:$0xf]
    %v955 = vld [vmem:[%s9 + $0xdc] sm:$0xf]
    %v956 = vld [vmem:[%s9 + $0xe0] sm:$0xf]
    %v957 = vld [vmem:[%s9 + $0xe4] sm:$0xf]
    %v958 = vld [vmem:[%s9 + $0xe8] sm:$0xf]
    %v959 = vld [vmem:[%s9 + $0xec] sm:$0xf]
    %v960 = vld [vmem:[%s9 + $0xf0] sm:$0xf]
    %v961 = vld [vmem:[%s9 + $0xf4] sm:$0xf]
    %v962 = vld [vmem:[%s9 + $0xf8] sm:$0xf]
    %v963 = vld [vmem:[%s9 + $0xfc] sm:$0xf]
    %v964 = vld [vmem:[%s10] sm:$0x1]
    %v966 = vperm.slane %v964, 0
    %v1032 = vunpack.c.l.b16 %v900
    %v1033 = vunpack.c.l.b16 %v901
    %v1034 = vunpack.c.l.b16 %v902
    %v1035 = vunpack.c.l.b16 %v903
    %v1036 = vunpack.c.l.b16 %v904
    %v1037 = vunpack.c.l.b16 %v905
    %v1038 = vunpack.c.l.b16 %v906
    %v1039 = vunpack.c.l.b16 %v907
    %v1040 = vunpack.c.l.b16 %v908
    %v1041 = vunpack.c.l.b16 %v909
    %v1042 = vunpack.c.l.b16 %v910
    %v1043 = vunpack.c.l.b16 %v911
    %v1044 = vunpack.c.l.b16 %v912
    %v1045 = vunpack.c.l.b16 %v913
    %v1046 = vunpack.c.l.b16 %v914
    %v1047 = vunpack.c.l.b16 %v915
    %v1048 = vunpack.c.l.b16 %v916
    %v1049 = vunpack.c.l.b16 %v917
    %v1050 = vunpack.c.l.b16 %v918
    %v1051 = vunpack.c.l.b16 %v919
    %v1052 = vunpack.c.l.b16 %v920
    %v1053 = vunpack.c.l.b16 %v921
    %v1054 = vunpack.c.l.b16 %v922
    %v1055 = vunpack.c.l.b16 %v923
    %v1056 = vunpack.c.l.b16 %v924
    %v1057 = vunpack.c.l.b16 %v925
    %v1058 = vunpack.c.l.b16 %v926
    %v1059 = vunpack.c.l.b16 %v927
    %v1060 = vunpack.c.l.b16 %v928
    %v1061 = vunpack.c.l.b16 %v929
    %v1062 = vunpack.c.l.b16 %v930
    %v1063 = vunpack.c.l.b16 %v931
    %v1064 = vunpack.c.l.b16 %v932
    %v1065 = vunpack.c.l.b16 %v933
    %v1066 = vunpack.c.l.b16 %v934
    %v1067 = vunpack.c.l.b16 %v935
    %v1068 = vunpack.c.l.b16 %v936
    %v1069 = vunpack.c.l.b16 %v937
    %v1070 = vunpack.c.l.b16 %v938
    %v1071 = vunpack.c.l.b16 %v939
    %v1072 = vunpack.c.l.b16 %v940
    %v1073 = vunpack.c.l.b16 %v941
    %v1074 = vunpack.c.l.b16 %v942
    %v1075 = vunpack.c.l.b16 %v943
    %v1076 = vunpack.c.l.b16 %v944
    %v1077 = vunpack.c.l.b16 %v945
    %v1078 = vunpack.c.l.b16 %v946
    %v1079 = vunpack.c.l.b16 %v947
    %v1080 = vunpack.c.l.b16 %v948
    %v1081 = vunpack.c.l.b16 %v949
    %v1082 = vunpack.c.l.b16 %v950
    %v1083 = vunpack.c.l.b16 %v951
    %v1084 = vunpack.c.l.b16 %v952
    %v1085 = vunpack.c.l.b16 %v953
    %v1086 = vunpack.c.l.b16 %v954
    %v1087 = vunpack.c.l.b16 %v955
    %v1088 = vunpack.c.l.b16 %v956
    %v1089 = vunpack.c.l.b16 %v957
    %v1090 = vunpack.c.l.b16 %v958
    %v1091 = vunpack.c.l.b16 %v959
    %v1092 = vunpack.c.l.b16 %v960
    %v1093 = vunpack.c.l.b16 %v961
    %v1094 = vunpack.c.l.b16 %v962
    %v1095 = vunpack.c.l.b16 %v963
    %v1096 = vpack.c.b16 %v1033, %v1032
    %v1097 = vpack.c.b16 %v1035, %v1034
    %v1098 = vpack.c.b16 %v1037, %v1036
    %v1099 = vpack.c.b16 %v1039, %v1038
    %v1100 = vpack.c.b16 %v1041, %v1040
    %v1101 = vpack.c.b16 %v1043, %v1042
    %v1102 = vpack.c.b16 %v1045, %v1044
    %v1103 = vpack.c.b16 %v1047, %v1046
    %v1104 = vpack.c.b16 %v1049, %v1048
    %v1105 = vpack.c.b16 %v1051, %v1050
    %v1106 = vpack.c.b16 %v1053, %v1052
    %v1107 = vpack.c.b16 %v1055, %v1054
    %v1108 = vpack.c.b16 %v1057, %v1056
    %v1109 = vpack.c.b16 %v1059, %v1058
    %v1110 = vpack.c.b16 %v1061, %v1060
    %v1111 = vpack.c.b16 %v1063, %v1062
    %v1112 = vpack.c.b16 %v1065, %v1064
    %v1113 = vpack.c.b16 %v1067, %v1066
    %v1114 = vpack.c.b16 %v1069, %v1068
    %v1115 = vpack.c.b16 %v1071, %v1070
    %v1116 = vpack.c.b16 %v1073, %v1072
    %v1117 = vpack.c.b16 %v1075, %v1074
    %v1118 = vpack.c.b16 %v1077, %v1076
    %v1119 = vpack.c.b16 %v1079, %v1078
    %v1120 = vpack.c.b16 %v1081, %v1080
    %v1121 = vpack.c.b16 %v1083, %v1082
    %v1122 = vpack.c.b16 %v1085, %v1084
    %v1123 = vpack.c.b16 %v1087, %v1086
    %v1124 = vpack.c.b16 %v1089, %v1088
    %v1125 = vpack.c.b16 %v1091, %v1090
    %v1126 = vpack.c.b16 %v1093, %v1092
    %v1127 = vpack.c.b16 %v1095, %v1094
    %1160 = vmatpush.bf16.msra.mxu0 %v1103
    %1161 = vmatpush.bf16.msra.mxu0 %v1102
    %1162 = vmatpush.bf16.msra.mxu0 %v1101
    %1163 = vmatpush.bf16.msra.mxu0 %v1100
    %1164 = vmatpush.bf16.msra.mxu0 %v1099
    %1165 = vmatpush.bf16.msra.mxu0 %v1098
    %1166 = vmatpush.bf16.msra.mxu0 %v1097
    %1167 = vmatpush.bf16.msra.mxu0 %v1096
    %1168 = vmatmul.bf16.gmra.mxu0 %v896
    %v1169 = vpop.f32.mrf.mxu0
    %v1170 = vadd.f32 %v966, %v1169
    %v1171 = vpop.f32.mrf.mxu0
    %v1172 = vadd.f32 %v966, %v1171
    %1173 = vdwg.mxu0
    %1174 = vmatpush.bf16.msra.mxu0 %v1111
    %1175 = vmatpush.bf16.msra.mxu0 %v1110
    %1176 = vmatpush.bf16.msra.mxu0 %v1109
    %1177 = vmatpush.bf16.msra.mxu0 %v1108
    %1178 = vmatpush.bf16.msra.mxu0 %v1107
    %1179 = vmatpush.bf16.msra.mxu0 %v1106
    %1180 = vmatpush.bf16.msra.mxu0 %v1105
    %1181 = vmatpush.bf16.msra.mxu0 %v1104
    %1182 = vmatmul.bf16.gmra.mxu0 %v897
    %v1183 = vpop.f32.mrf.mxu0
    %v1184 = vadd.f32 %v1170, %v1183
    %v1185 = vpop.f32.mrf.mxu0
    %v1186 = vadd.f32 %v1172, %v1185
    %1187 = vdwg.mxu0
    %1188 = vmatpush.bf16.msra.mxu0 %v1119
    %1189 = vmatpush.bf16.msra.mxu0 %v1118
    %1190 = vmatpush.bf16.msra.mxu0 %v1117
    %1191 = vmatpush.bf16.msra.mxu0 %v1116
    %1192 = vmatpush.bf16.msra.mxu0 %v1115
    %1193 = vmatpush.bf16.msra.mxu0 %v1114
    %1194 = vmatpush.bf16.msra.mxu0 %v1113
    %1195 = vmatpush.bf16.msra.mxu0 %v1112
    %1196 = vmatmul.bf16.gmra.mxu0 %v898
    %v1197 = vpop.f32.mrf.mxu0
    %v1198 = vadd.f32 %v1184, %v1197
    %v1199 = vpop.f32.mrf.mxu0
    %v1200 = vadd.f32 %v1186, %v1199
    %1201 = vdwg.mxu0
    %1202 = vmatpush.bf16.msra.mxu0 %v1127
    %1203 = vmatpush.bf16.msra.mxu0 %v1126
    %1204 = vmatpush.bf16.msra.mxu0 %v1125
    %1205 = vmatpush.bf16.msra.mxu0 %v1124
    %1206 = vmatpush.bf16.msra.mxu0 %v1123
    %1207 = vmatpush.bf16.msra.mxu0 %v1122
    %1208 = vmatpush.bf16.msra.mxu0 %v1121
    %1209 = vmatpush.bf16.msra.mxu0 %v1120
    %1210 = vmatmul.bf16.gmra.mxu0 %v899
    %v1211 = vpop.f32.mrf.mxu0
    %v1212 = vadd.f32 %v1198, %v1211
    %v1213 = vpop.f32.mrf.mxu0
    %v1214 = vadd.f32 %v1200, %v1213
    %1215 = vdwg.mxu0
    %v1216 = vadd.f32 %v768, %v1212
    %v1217 = vadd.f32 %v769, %v1214
    %v1218 = vsel %vm69, %v1216, 0.0
    %1219 = vadd.xlane.f32.xlu0 %v1218
    %v1220 = vpop.xlane.xlu0 %1219
    %v1221 = vsel %vm69, %v1217, 0.0
    %1222 = vadd.xlane.f32.xlu0 %v1221
    %v1223 = vpop.xlane.xlu0 %1222
    %v1224 = vmul.f32 %v1220, %v719
    %v1225 = vmul.f32 %v1223, %v719
    %v1226 = vsub.f32 %v1216, %v1224
    %v1227 = vsub.f32 %v1217, %v1225
    %v1228 = vmul.f32 %v1226, %v1226
    %v1229 = vmul.f32 %v1227, %v1227
    %v1230 = vsel %vm69, %v1228, 0.0
    %1231 = vadd.xlane.f32.xlu0 %v1230
    %v1232 = vpop.xlane.xlu0 %1231
    %v1233 = vsel %vm69, %v1229, 0.0
    %1234 = vadd.xlane.f32.xlu0 %v1233
    %v1235 = vpop.xlane.xlu0 %1234
    %v1236 = vmul.f32 %v1232, %v719
    %v1237 = vmul.f32 %v1235, %v719
    %v1238 = vadd.f32 %v1236, 1e-05
    %v1239 = vadd.f32 %v1237, 1e-05
    %v1240 = vrsqrt.pop %v1238
    %v1241 = vmul.f32 %v1240, %v1238
    %v1242 = vmul.f32 %v1241, %v1240
    %v1243 = vmul.f32 0.5, %v1242
    %v1244 = vsub.f32 1.5, %v1243
    %v1245 = vmul.f32 %v1240, %v1244
    %vm1246 = vweird.f32 %v1238
    %vm1247 = vweird.f32 %v1240
    %vm1248 = vmor %vm1246, %vm1247
    %v1249 = vsel %vm1248, %v1240, %v1245
    %v1250 = vrsqrt.pop %v1239
    %v1251 = vmul.f32 %v1250, %v1239
    %v1252 = vmul.f32 %v1251, %v1250
    %v1253 = vmul.f32 0.5, %v1252
    %v1254 = vsub.f32 1.5, %v1253
    %v1255 = vmul.f32 %v1250, %v1254
    %vm1256 = vweird.f32 %v1239
    %vm1257 = vweird.f32 %v1250
    %vm1258 = vmor %vm1256, %vm1257
    %v1259 = vsel %vm1258, %v1250, %v1255
    %v1260 = vmul.f32 %v1226, %v1249
    %v1261 = vmul.f32 %v1227, %v1259
    %v1262 = vld [vmem:[%s11] sm:$0x1]
    %v1264 = vperm.slane %v1262, 0
    %v1266 = vmul.f32 %v1260, %v1264
    %v1267 = vmul.f32 %v1261, %v1264
    %v1268 = vld [vmem:[%s12] sm:$0x1]
    %v1270 = vperm.slane %v1268, 0
    %v1272 = vadd.f32 %v1266, %v1270
    %v1273 = vadd.f32 %v1267, %v1270
    %v1274 = vpack.c.bf16 %v1273, %v1272
    %s1275 = scalar_lea.vmem %s1, 16
    %v1276 = vld [vmem:[%s1275] sm:$0xf]
    %v1277 = vld [vmem:[%s1275 + $0x4] sm:$0xf]
    %v1278 = vld [vmem:[%s1275 + $0x8] sm:$0xf]
    %v1279 = vld [vmem:[%s1275 + $0xc] sm:$0xf]
    %s1280 = scalar_lea.vmem %s2, 1
    %v1281 = vld [vmem:[%s1280] sm:$0x1]
    %v1283 = vperm.slane %v1281, 0
    %v1289 = vunpack.c.l.b16 %v1276
    %v1290 = vunpack.c.l.b16 %v1277
    %v1291 = vunpack.c.l.b16 %v1278
    %v1292 = vunpack.c.l.b16 %v1279
    %v1293 = vpack.c.b16 %v1290, %v1289
    %v1294 = vpack.c.b16 %v1292, %v1291
    %v1298 = vsel %vm69, %v1274, 0
    %1300 = vmatpush.bf16.msra.mxu0 0
    %1301 = vmatpush.bf16.msra.mxu0 0
    %1302 = vmatpush.bf16.msra.mxu0 0
    %1303 = vmatpush.bf16.msra.mxu0 0
    %1304 = vmatpush.bf16.msra.mxu0 0
    %1305 = vmatpush.bf16.msra.mxu0 0
    %1306 = vmatpush.bf16.msra.mxu0 %v1294
    %1307 = vmatpush.bf16.msra.mxu0 %v1293
    %1308 = vmatmul.bf16.gmra.mxu0 %v1298
    %v1309 = vpop.f32.mrf.mxu0
    %v1310 = vadd.f32 %v1283, %v1309
    %v1311 = vpop.f32.mrf.mxu0
    %v1312 = vadd.f32 %v1283, %v1311
    %1313 = vdwg.mxu0
    %1316 = vrot.lane.b32.xlu0 %v1310, 120
    %v1317 = vpop.permute.xlu0 %1316
    %1318 = vrot.lane.b32.xlu0 %v1312, 120
    %v1319 = vpop.permute.xlu0 %1318
    %1322 = vrot.lane.b32.xlu0 %v1310, 112
    %v1323 = vpop.permute.xlu0 %1322
    %1324 = vrot.lane.b32.xlu0 %v1312, 112
    %v1325 = vpop.permute.xlu0 %1324
    %1328 = vrot.lane.b32.xlu0 %v1310, 104
    %v1329 = vpop.permute.xlu0 %1328
    %1330 = vrot.lane.b32.xlu0 %v1312, 104
    %v1331 = vpop.permute.xlu0 %1330
    %v1334 = vpack.c.bf16 %v1310, %v1310
    %v1335 = vpack.c.bf16 %v1312, %v1312
    %v1336 = vpack.c.bf16 %v1317, %v1317
    %v1337 = vpack.c.bf16 %v1319, %v1319
    %v1338 = vpack.c.bf16 %v1323, %v1323
    %v1339 = vpack.c.bf16 %v1325, %v1325
    %v1340 = vpack.c.bf16 %v1329, %v1329
    %v1341 = vpack.c.bf16 %v1331, %v1331
    %v1343 = vunpack.c.l.b16 %v1334
    %v1344 = vpack.c.b16 %v1343, %v1343
    %1345 = vrot.lane.b32.xlu0 %v1344, 96
    %v1346 = vpop.permute.xlu0 %1345
    %v1348 = vsel %vm120, %v1334, 0
    %v1351 = vsel %vm120, %v1346, 0
    %1353 = vmatpush.bf16.xpose.msra.mxu0 0
    %1354 = vmatpush.bf16.xpose.msra.mxu0 0
    %1355 = vmatpush.bf16.xpose.msra.mxu0 0
    %1356 = vmatpush.bf16.xpose.msra.mxu0 0
    %1357 = vmatpush.bf16.xpose.msra.mxu0 0
    %1358 = vmatpush.bf16.xpose.msra.mxu0 0
    %1359 = vmatpush.bf16.xpose.msra.mxu0 0
    %1360 = vmatpush.bf16.xpose.msra.mxu0 %v1351
    %1361 = vmatmul.bf16.gmra.mxu0 %v1348
    %v1362 = vpop.f32.mrf.mxu0
    %v1363 = vadd.f32 0.0, %v1362
    %v1364 = vpop.f32.mrf.mxu0
    %1365 = vdwg.mxu0
    %v1367 = vunpack.c.l.b16 %v1335
    %v1368 = vpack.c.b16 %v1367, %v1367
    %1369 = vrot.lane.b32.xlu0 %v1368, 96
    %v1370 = vpop.permute.xlu0 %1369
    %v1372 = vsel %vm120, %v1335, 0
    %v1375 = vsel %vm120, %v1370, 0
    %1377 = vmatpush.bf16.xpose.msra.mxu0 0
    %1378 = vmatpush.bf16.xpose.msra.mxu0 0
    %1379 = vmatpush.bf16.xpose.msra.mxu0 0
    %1380 = vmatpush.bf16.xpose.msra.mxu0 0
    %1381 = vmatpush.bf16.xpose.msra.mxu0 0
    %1382 = vmatpush.bf16.xpose.msra.mxu0 0
    %1383 = vmatpush.bf16.xpose.msra.mxu0 0
    %1384 = vmatpush.bf16.xpose.msra.mxu0 %v1375
    %1385 = vmatmul.bf16.gmra.mxu0 %v1372
    %v1386 = vpop.f32.mrf.mxu0
    %v1387 = vadd.f32 0.0, %v1386
    %v1388 = vpop.f32.mrf.mxu0
    %1389 = vdwg.mxu0
    %v1391 = vunpack.c.l.b16 %v1336
    %v1392 = vpack.c.b16 %v1391, %v1391
    %1393 = vrot.lane.b32.xlu0 %v1392, 96
    %v1394 = vpop.permute.xlu0 %1393
    %v1396 = vsel %vm120, %v1336, 0
    %v1399 = vsel %vm120, %v1394, 0
    %1401 = vmatpush.bf16.xpose.msra.mxu0 0
    %1402 = vmatpush.bf16.xpose.msra.mxu0 0
    %1403 = vmatpush.bf16.xpose.msra.mxu0 0
    %1404 = vmatpush.bf16.xpose.msra.mxu0 0
    %1405 = vmatpush.bf16.xpose.msra.mxu0 0
    %1406 = vmatpush.bf16.xpose.msra.mxu0 0
    %1407 = vmatpush.bf16.xpose.msra.mxu0 0
    %1408 = vmatpush.bf16.xpose.msra.mxu0 %v1399
    %1409 = vmatmul.bf16.gmra.mxu0 %v1396
    %v1410 = vpop.f32.mrf.mxu0
    %v1411 = vadd.f32 0.0, %v1410
    %v1412 = vpop.f32.mrf.mxu0
    %1413 = vdwg.mxu0
    %v1415 = vunpack.c.l.b16 %v1337
    %v1416 = vpack.c.b16 %v1415, %v1415
    %1417 = vrot.lane.b32.xlu0 %v1416, 96
    %v1418 = vpop.permute.xlu0 %1417
    %v1420 = vsel %vm120, %v1337, 0
    %v1423 = vsel %vm120, %v1418, 0
    %1425 = vmatpush.bf16.xpose.msra.mxu0 0
    %1426 = vmatpush.bf16.xpose.msra.mxu0 0
    %1427 = vmatpush.bf16.xpose.msra.mxu0 0
    %1428 = vmatpush.bf16.xpose.msra.mxu0 0
    %1429 = vmatpush.bf16.xpose.msra.mxu0 0
    %1430 = vmatpush.bf16.xpose.msra.mxu0 0
    %1431 = vmatpush.bf16.xpose.msra.mxu0 0
    %1432 = vmatpush.bf16.xpose.msra.mxu0 %v1423
    %1433 = vmatmul.bf16.gmra.mxu0 %v1420
    %v1434 = vpop.f32.mrf.mxu0
    %v1435 = vadd.f32 0.0, %v1434
    %v1436 = vpop.f32.mrf.mxu0
    %1437 = vdwg.mxu0
    %v1439 = vunpack.c.l.b16 %v1338
    %v1440 = vpack.c.b16 %v1439, %v1439
    %1441 = vrot.lane.b32.xlu0 %v1440, 96
    %v1442 = vpop.permute.xlu0 %1441
    %v1444 = vsel %vm120, %v1338, 0
    %v1447 = vsel %vm120, %v1442, 0
    %1449 = vmatpush.bf16.xpose.msra.mxu0 0
    %1450 = vmatpush.bf16.xpose.msra.mxu0 0
    %1451 = vmatpush.bf16.xpose.msra.mxu0 0
    %1452 = vmatpush.bf16.xpose.msra.mxu0 0
    %1453 = vmatpush.bf16.xpose.msra.mxu0 0
    %1454 = vmatpush.bf16.xpose.msra.mxu0 0
    %1455 = vmatpush.bf16.xpose.msra.mxu0 0
    %1456 = vmatpush.bf16.xpose.msra.mxu0 %v1447
    %1457 = vmatmul.bf16.gmra.mxu0 %v1444
    %v1458 = vpop.f32.mrf.mxu0
    %v1459 = vadd.f32 0.0, %v1458
    %v1460 = vpop.f32.mrf.mxu0
    %1461 = vdwg.mxu0
    %v1463 = vunpack.c.l.b16 %v1339
    %v1464 = vpack.c.b16 %v1463, %v1463
    %1465 = vrot.lane.b32.xlu0 %v1464, 96
    %v1466 = vpop.permute.xlu0 %1465
    %v1468 = vsel %vm120, %v1339, 0
    %v1471 = vsel %vm120, %v1466, 0
    %1473 = vmatpush.bf16.xpose.msra.mxu0 0
    %1474 = vmatpush.bf16.xpose.msra.mxu0 0
    %1475 = vmatpush.bf16.xpose.msra.mxu0 0
    %1476 = vmatpush.bf16.xpose.msra.mxu0 0
    %1477 = vmatpush.bf16.xpose.msra.mxu0 0
    %1478 = vmatpush.bf16.xpose.msra.mxu0 0
    %1479 = vmatpush.bf16.xpose.msra.mxu0 0
    %1480 = vmatpush.bf16.xpose.msra.mxu0 %v1471
    %1481 = vmatmul.bf16.gmra.mxu0 %v1468
    %v1482 = vpop.f32.mrf.mxu0
    %v1483 = vadd.f32 0.0, %v1482
    %v1484 = vpop.f32.mrf.mxu0
    %1485 = vdwg.mxu0
    %v1487 = vunpack.c.l.b16 %v1340
    %v1488 = vpack.c.b16 %v1487, %v1487
    %1489 = vrot.lane.b32.xlu0 %v1488, 96
    %v1490 = vpop.permute.xlu0 %1489
    %v1492 = vsel %vm120, %v1340, 0
    %v1495 = vsel %vm120, %v1490, 0
    %1497 = vmatpush.bf16.xpose.msra.mxu0 0
    %1498 = vmatpush.bf16.xpose.msra.mxu0 0
    %1499 = vmatpush.bf16.xpose.msra.mxu0 0
    %1500 = vmatpush.bf16.xpose.msra.mxu0 0
    %1501 = vmatpush.bf16.xpose.msra.mxu0 0
    %1502 = vmatpush.bf16.xpose.msra.mxu0 0
    %1503 = vmatpush.bf16.xpose.msra.mxu0 0
    %1504 = vmatpush.bf16.xpose.msra.mxu0 %v1495
    %1505 = vmatmul.bf16.gmra.mxu0 %v1492
    %v1506 = vpop.f32.mrf.mxu0
    %v1507 = vadd.f32 0.0, %v1506
    %v1508 = vpop.f32.mrf.mxu0
    %1509 = vdwg.mxu0
    %v1511 = vunpack.c.l.b16 %v1341
    %v1512 = vpack.c.b16 %v1511, %v1511
    %1513 = vrot.lane.b32.xlu0 %v1512, 96
    %v1514 = vpop.permute.xlu0 %1513
    %v1516 = vsel %vm120, %v1341, 0
    %v1519 = vsel %vm120, %v1514, 0
    %1521 = vmatpush.bf16.xpose.msra.mxu0 0
    %1522 = vmatpush.bf16.xpose.msra.mxu0 0
    %1523 = vmatpush.bf16.xpose.msra.mxu0 0
    %1524 = vmatpush.bf16.xpose.msra.mxu0 0
    %1525 = vmatpush.bf16.xpose.msra.mxu0 0
    %1526 = vmatpush.bf16.xpose.msra.mxu0 0
    %1527 = vmatpush.bf16.xpose.msra.mxu0 0
    %1528 = vmatpush.bf16.xpose.msra.mxu0 %v1519
    %1529 = vmatmul.bf16.gmra.mxu0 %v1516
    %v1530 = vpop.f32.mrf.mxu0
    %v1531 = vadd.f32 0.0, %v1530
    %v1532 = vpop.f32.mrf.mxu0
    %1533 = vdwg.mxu0
    %v1534 = vsel %vm120, %v1363, -inf
    %1535 = vmax.xlane.f32.xlu0 %v1534
    %v1536 = vpop.xlane.xlu0 %1535
    %v1537 = vsel %vm120, %v1387, -inf
    %1538 = vmax.xlane.f32.xlu0 %v1537
    %v1539 = vpop.xlane.xlu0 %1538
    %v1540 = vsel %vm120, %v1411, -inf
    %1541 = vmax.xlane.f32.xlu0 %v1540
    %v1542 = vpop.xlane.xlu0 %1541
    %v1543 = vsel %vm120, %v1435, -inf
    %1544 = vmax.xlane.f32.xlu0 %v1543
    %v1545 = vpop.xlane.xlu0 %1544
    %v1546 = vsel %vm120, %v1459, -inf
    %1547 = vmax.xlane.f32.xlu0 %v1546
    %v1548 = vpop.xlane.xlu0 %1547
    %v1549 = vsel %vm120, %v1483, -inf
    %1550 = vmax.xlane.f32.xlu0 %v1549
    %v1551 = vpop.xlane.xlu0 %1550
    %v1552 = vsel %vm120, %v1507, -inf
    %1553 = vmax.xlane.f32.xlu0 %v1552
    %v1554 = vpop.xlane.xlu0 %1553
    %v1555 = vsel %vm120, %v1531, -inf
    %1556 = vmax.xlane.f32.xlu0 %v1555
    %v1557 = vpop.xlane.xlu0 %1556
    %v1558 = vsub.f32 %v1363, %v1536
    %v1559 = vsub.f32 %v1387, %v1539
    %v1560 = vsub.f32 %v1411, %v1542
    %v1561 = vsub.f32 %v1435, %v1545
    %v1562 = vsub.f32 %v1459, %v1548
    %v1563 = vsub.f32 %v1483, %v1551
    %v1564 = vsub.f32 %v1507, %v1554
    %v1565 = vsub.f32 %v1531, %v1557
    %v1566 = vmul.f32 %v1558, 1.442695
    %v1567 = vpow.pop %v1566
    %v1568 = vmul.f32 %v1559, 1.442695
    %v1569 = vpow.pop %v1568
    %v1570 = vmul.f32 %v1560, 1.442695
    %v1571 = vpow.pop %v1570
    %v1572 = vmul.f32 %v1561, 1.442695
    %v1573 = vpow.pop %v1572
    %v1574 = vmul.f32 %v1562, 1.442695
    %v1575 = vpow.pop %v1574
    %v1576 = vmul.f32 %v1563, 1.442695
    %v1577 = vpow.pop %v1576
    %v1578 = vmul.f32 %v1564, 1.442695
    %v1579 = vpow.pop %v1578
    %v1580 = vmul.f32 %v1565, 1.442695
    %v1581 = vpow.pop %v1580
    %v1582 = vsel %vm120, %v1567, 0.0
    %1583 = vadd.xlane.f32.xlu0 %v1582
    %v1584 = vpop.xlane.xlu0 %1583
    %v1585 = vsel %vm120, %v1569, 0.0
    %1586 = vadd.xlane.f32.xlu0 %v1585
    %v1587 = vpop.xlane.xlu0 %1586
    %v1588 = vsel %vm120, %v1571, 0.0
    %1589 = vadd.xlane.f32.xlu0 %v1588
    %v1590 = vpop.xlane.xlu0 %1589
    %v1591 = vsel %vm120, %v1573, 0.0
    %1592 = vadd.xlane.f32.xlu0 %v1591
    %v1593 = vpop.xlane.xlu0 %1592
    %v1594 = vsel %vm120, %v1575, 0.0
    %1595 = vadd.xlane.f32.xlu0 %v1594
    %v1596 = vpop.xlane.xlu0 %1595
    %v1597 = vsel %vm120, %v1577, 0.0
    %1598 = vadd.xlane.f32.xlu0 %v1597
    %v1599 = vpop.xlane.xlu0 %1598
    %v1600 = vsel %vm120, %v1579, 0.0
    %1601 = vadd.xlane.f32.xlu0 %v1600
    %v1602 = vpop.xlane.xlu0 %1601
    %v1603 = vsel %vm120, %v1581, 0.0
    %1604 = vadd.xlane.f32.xlu0 %v1603
    %v1605 = vpop.xlane.xlu0 %1604
    %v1606 = vrcp.pop %v1584
    %v1607 = vrcp.pop %v1587
    %v1608 = vrcp.pop %v1590
    %v1609 = vrcp.pop %v1593
    %v1610 = vrcp.pop %v1596
    %v1611 = vrcp.pop %v1599
    %v1612 = vrcp.pop %v1602
    %v1613 = vrcp.pop %v1605
    %v1614 = vmul.f32 %v1567, %v1606
    %v1615 = vmul.f32 %v1569, %v1607
    %v1616 = vmul.f32 %v1571, %v1608
    %v1617 = vmul.f32 %v1573, %v1609
    %v1618 = vmul.f32 %v1575, %v1610
    %v1619 = vmul.f32 %v1577, %v1611
    %v1620 = vmul.f32 %v1579, %v1612
    %v1621 = vmul.f32 %v1581, %v1613
    %v1622 = vpack.c.bf16 %v1614, %v1614
    %v1623 = vpack.c.bf16 %v1615, %v1615
    %v1624 = vpack.c.bf16 %v1616, %v1616
    %v1625 = vpack.c.bf16 %v1617, %v1617
    %v1626 = vpack.c.bf16 %v1618, %v1618
    %v1627 = vpack.c.bf16 %v1619, %v1619
    %v1628 = vpack.c.bf16 %v1620, %v1620
    %v1629 = vpack.c.bf16 %v1621, %v1621
    %1630 = vrot.lane.b32.xlu0 %v1344, 64
    %v1631 = vpop.permute.xlu0 %1630
    %v1633 = vsel %vm120, %v1622, 0
    %v1636 = vsel %vm409, %v1631, 0
    %1638 = vmatpush.bf16.msra.mxu0 0
    %1639 = vmatpush.bf16.msra.mxu0 0
    %1640 = vmatpush.bf16.msra.mxu0 0
    %1641 = vmatpush.bf16.msra.mxu0 0
    %1642 = vmatpush.bf16.msra.mxu0 0
    %1643 = vmatpush.bf16.msra.mxu0 0
    %1644 = vmatpush.bf16.msra.mxu0 0
    %1645 = vmatpush.bf16.msra.mxu0 %v1636
    %1646 = vmatmul.bf16.gmra.mxu0 %v1633
    %v1647 = vpop.f32.mrf.mxu0
    %v1648 = vadd.f32 0.0, %v1647
    %v1649 = vpop.f32.mrf.mxu0
    %1650 = vdwg.mxu0
    %1651 = vrot.lane.b32.xlu0 %v1368, 64
    %v1652 = vpop.permute.xlu0 %1651
    %v1654 = vsel %vm120, %v1623, 0
    %v1657 = vsel %vm409, %v1652, 0
    %1659 = vmatpush.bf16.msra.mxu0 0
    %1660 = vmatpush.bf16.msra.mxu0 0
    %1661 = vmatpush.bf16.msra.mxu0 0
    %1662 = vmatpush.bf16.msra.mxu0 0
    %1663 = vmatpush.bf16.msra.mxu0 0
    %1664 = vmatpush.bf16.msra.mxu0 0
    %1665 = vmatpush.bf16.msra.mxu0 0
    %1666 = vmatpush.bf16.msra.mxu0 %v1657
    %1667 = vmatmul.bf16.gmra.mxu0 %v1654
    %v1668 = vpop.f32.mrf.mxu0
    %v1669 = vadd.f32 0.0, %v1668
    %v1670 = vpop.f32.mrf.mxu0
    %1671 = vdwg.mxu0
    %1672 = vrot.lane.b32.xlu0 %v1392, 64
    %v1673 = vpop.permute.xlu0 %1672
    %v1675 = vsel %vm120, %v1624, 0
    %v1678 = vsel %vm409, %v1673, 0
    %1680 = vmatpush.bf16.msra.mxu0 0
    %1681 = vmatpush.bf16.msra.mxu0 0
    %1682 = vmatpush.bf16.msra.mxu0 0
    %1683 = vmatpush.bf16.msra.mxu0 0
    %1684 = vmatpush.bf16.msra.mxu0 0
    %1685 = vmatpush.bf16.msra.mxu0 0
    %1686 = vmatpush.bf16.msra.mxu0 0
    %1687 = vmatpush.bf16.msra.mxu0 %v1678
    %1688 = vmatmul.bf16.gmra.mxu0 %v1675
    %v1689 = vpop.f32.mrf.mxu0
    %v1690 = vadd.f32 0.0, %v1689
    %v1691 = vpop.f32.mrf.mxu0
    %1692 = vdwg.mxu0
    %1693 = vrot.lane.b32.xlu0 %v1416, 64
    %v1694 = vpop.permute.xlu0 %1693
    %v1696 = vsel %vm120, %v1625, 0
    %v1699 = vsel %vm409, %v1694, 0
    %1701 = vmatpush.bf16.msra.mxu0 0
    %1702 = vmatpush.bf16.msra.mxu0 0
    %1703 = vmatpush.bf16.msra.mxu0 0
    %1704 = vmatpush.bf16.msra.mxu0 0
    %1705 = vmatpush.bf16.msra.mxu0 0
    %1706 = vmatpush.bf16.msra.mxu0 0
    %1707 = vmatpush.bf16.msra.mxu0 0
    %1708 = vmatpush.bf16.msra.mxu0 %v1699
    %1709 = vmatmul.bf16.gmra.mxu0 %v1696
    %v1710 = vpop.f32.mrf.mxu0
    %v1711 = vadd.f32 0.0, %v1710
    %v1712 = vpop.f32.mrf.mxu0
    %1713 = vdwg.mxu0
    %1714 = vrot.lane.b32.xlu0 %v1440, 64
    %v1715 = vpop.permute.xlu0 %1714
    %v1717 = vsel %vm120, %v1626, 0
    %v1720 = vsel %vm409, %v1715, 0
    %1722 = vmatpush.bf16.msra.mxu0 0
    %1723 = vmatpush.bf16.msra.mxu0 0
    %1724 = vmatpush.bf16.msra.mxu0 0
    %1725 = vmatpush.bf16.msra.mxu0 0
    %1726 = vmatpush.bf16.msra.mxu0 0
    %1727 = vmatpush.bf16.msra.mxu0 0
    %1728 = vmatpush.bf16.msra.mxu0 0
    %1729 = vmatpush.bf16.msra.mxu0 %v1720
    %1730 = vmatmul.bf16.gmra.mxu0 %v1717
    %v1731 = vpop.f32.mrf.mxu0
    %v1732 = vadd.f32 0.0, %v1731
    %v1733 = vpop.f32.mrf.mxu0
    %1734 = vdwg.mxu0
    %1735 = vrot.lane.b32.xlu0 %v1464, 64
    %v1736 = vpop.permute.xlu0 %1735
    %v1738 = vsel %vm120, %v1627, 0
    %v1741 = vsel %vm409, %v1736, 0
    %1743 = vmatpush.bf16.msra.mxu0 0
    %1744 = vmatpush.bf16.msra.mxu0 0
    %1745 = vmatpush.bf16.msra.mxu0 0
    %1746 = vmatpush.bf16.msra.mxu0 0
    %1747 = vmatpush.bf16.msra.mxu0 0
    %1748 = vmatpush.bf16.msra.mxu0 0
    %1749 = vmatpush.bf16.msra.mxu0 0
    %1750 = vmatpush.bf16.msra.mxu0 %v1741
    %1751 = vmatmul.bf16.gmra.mxu0 %v1738
    %v1752 = vpop.f32.mrf.mxu0
    %v1753 = vadd.f32 0.0, %v1752
    %v1754 = vpop.f32.mrf.mxu0
    %1755 = vdwg.mxu0
    %1756 = vrot.lane.b32.xlu0 %v1488, 64
    %v1757 = vpop.permute.xlu0 %1756
    %v1759 = vsel %vm120, %v1628, 0
    %v1762 = vsel %vm409, %v1757, 0
    %1764 = vmatpush.bf16.msra.mxu0 0
    %1765 = vmatpush.bf16.msra.mxu0 0
    %1766 = vmatpush.bf16.msra.mxu0 0
    %1767 = vmatpush.bf16.msra.mxu0 0
    %1768 = vmatpush.bf16.msra.mxu0 0
    %1769 = vmatpush.bf16.msra.mxu0 0
    %1770 = vmatpush.bf16.msra.mxu0 0
    %1771 = vmatpush.bf16.msra.mxu0 %v1762
    %1772 = vmatmul.bf16.gmra.mxu0 %v1759
    %v1773 = vpop.f32.mrf.mxu0
    %v1774 = vadd.f32 0.0, %v1773
    %v1775 = vpop.f32.mrf.mxu0
    %1776 = vdwg.mxu0
    %1777 = vrot.lane.b32.xlu0 %v1512, 64
    %v1778 = vpop.permute.xlu0 %1777
    %v1780 = vsel %vm120, %v1629, 0
    %v1783 = vsel %vm409, %v1778, 0
    %1785 = vmatpush.bf16.msra.mxu0 0
    %1786 = vmatpush.bf16.msra.mxu0 0
    %1787 = vmatpush.bf16.msra.mxu0 0
    %1788 = vmatpush.bf16.msra.mxu0 0
    %1789 = vmatpush.bf16.msra.mxu0 0
    %1790 = vmatpush.bf16.msra.mxu0 0
    %1791 = vmatpush.bf16.msra.mxu0 0
    %1792 = vmatpush.bf16.msra.mxu0 %v1783
    %1793 = vmatmul.bf16.gmra.mxu0 %v1780
    %v1794 = vpop.f32.mrf.mxu0
    %v1795 = vadd.f32 0.0, %v1794
    %v1796 = vpop.f32.mrf.mxu0
    %1797 = vdwg.mxu0
    %v1798 = vpack.c.bf16 %v1648, %v1648
    %v1799 = vpack.c.bf16 %v1669, %v1669
    %v1800 = vpack.c.bf16 %v1690, %v1690
    %v1801 = vpack.c.bf16 %v1711, %v1711
    %v1802 = vpack.c.bf16 %v1732, %v1732
    %v1803 = vpack.c.bf16 %v1753, %v1753
    %v1804 = vpack.c.bf16 %v1774, %v1774
    %v1805 = vpack.c.bf16 %v1795, %v1795
    %s1806 = scalar_lea.vmem %s3, 16
    %v1807 = vld [vmem:[%s1806] sm:$0xf]
    %v1808 = vld [vmem:[%s1806 + $0x4] sm:$0xf]
    %v1809 = vld [vmem:[%s1806 + $0x8] sm:$0xf]
    %v1810 = vld [vmem:[%s1806 + $0xc] sm:$0xf]
    %v1813 = vunpack.c.l.b16 %v1798
    %v1814 = vunpack.c.l.b16 %v1799
    %v1815 = vpack.c.b16 %v1814, %v1813
    %v1817 = vsel %vm120, %v1815, 0
    %v1820 = vsel %vm409, %v1807, 0
    %1822 = vmatpush.bf16.msra.mxu0 0
    %1823 = vmatpush.bf16.msra.mxu0 0
    %1824 = vmatpush.bf16.msra.mxu0 0
    %1825 = vmatpush.bf16.msra.mxu0 0
    %1826 = vmatpush.bf16.msra.mxu0 0
    %1827 = vmatpush.bf16.msra.mxu0 0
    %1828 = vmatpush.bf16.msra.mxu0 0
    %1829 = vmatpush.bf16.msra.mxu0 %v1820
    %1830 = vmatmul.bf16.gmra.mxu0 %v1817
    %v1831 = vpop.f32.mrf.mxu0
    %v1832 = vadd.f32 0.0, %v1831
    %v1833 = vpop.f32.mrf.mxu0
    %v1834 = vadd.f32 0.0, %v1833
    %1835 = vdwg.mxu0
    %v1838 = vunpack.c.l.b16 %v1800
    %v1839 = vunpack.c.l.b16 %v1801
    %v1840 = vpack.c.b16 %v1839, %v1838
    %v1842 = vsel %vm120, %v1840, 0
    %v1845 = vsel %vm409, %v1808, 0
    %1847 = vmatpush.bf16.msra.mxu0 0
    %1848 = vmatpush.bf16.msra.mxu0 0
    %1849 = vmatpush.bf16.msra.mxu0 0
    %1850 = vmatpush.bf16.msra.mxu0 0
    %1851 = vmatpush.bf16.msra.mxu0 0
    %1852 = vmatpush.bf16.msra.mxu0 0
    %1853 = vmatpush.bf16.msra.mxu0 0
    %1854 = vmatpush.bf16.msra.mxu0 %v1845
    %1855 = vmatmul.bf16.gmra.mxu0 %v1842
    %v1856 = vpop.f32.mrf.mxu0
    %v1857 = vadd.f32 0.0, %v1856
    %v1858 = vpop.f32.mrf.mxu0
    %v1859 = vadd.f32 0.0, %v1858
    %1860 = vdwg.mxu0
    %v1863 = vunpack.c.l.b16 %v1802
    %v1864 = vunpack.c.l.b16 %v1803
    %v1865 = vpack.c.b16 %v1864, %v1863
    %v1867 = vsel %vm120, %v1865, 0
    %v1870 = vsel %vm409, %v1809, 0
    %1872 = vmatpush.bf16.msra.mxu0 0
    %1873 = vmatpush.bf16.msra.mxu0 0
    %1874 = vmatpush.bf16.msra.mxu0 0
    %1875 = vmatpush.bf16.msra.mxu0 0
    %1876 = vmatpush.bf16.msra.mxu0 0
    %1877 = vmatpush.bf16.msra.mxu0 0
    %1878 = vmatpush.bf16.msra.mxu0 0
    %1879 = vmatpush.bf16.msra.mxu0 %v1870
    %1880 = vmatmul.bf16.gmra.mxu0 %v1867
    %v1881 = vpop.f32.mrf.mxu0
    %v1882 = vadd.f32 0.0, %v1881
    %v1883 = vpop.f32.mrf.mxu0
    %v1884 = vadd.f32 0.0, %v1883
    %1885 = vdwg.mxu0
    %v1888 = vunpack.c.l.b16 %v1804
    %v1889 = vunpack.c.l.b16 %v1805
    %v1890 = vpack.c.b16 %v1889, %v1888
    %v1892 = vsel %vm120, %v1890, 0
    %v1895 = vsel %vm409, %v1810, 0
    %1897 = vmatpush.bf16.msra.mxu0 0
    %1898 = vmatpush.bf16.msra.mxu0 0
    %1899 = vmatpush.bf16.msra.mxu0 0
    %1900 = vmatpush.bf16.msra.mxu0 0
    %1901 = vmatpush.bf16.msra.mxu0 0
    %1902 = vmatpush.bf16.msra.mxu0 0
    %1903 = vmatpush.bf16.msra.mxu0 0
    %1904 = vmatpush.bf16.msra.mxu0 %v1895
    %1905 = vmatmul.bf16.gmra.mxu0 %v1892
    %v1906 = vpop.f32.mrf.mxu0
    %v1907 = vadd.f32 0.0, %v1906
    %v1908 = vpop.f32.mrf.mxu0
    %v1909 = vadd.f32 0.0, %v1908
    %1910 = vdwg.mxu0
    %v1911 = vsel %vm69, %v1832, 0.0
    %v1912 = vsel %vm69, %v1857, 0.0
    %v1913 = vadd.f32 %v1911, %v1912
    %v1914 = vsel %vm69, %v1882, 0.0
    %v1915 = vadd.f32 %v1913, %v1914
    %v1916 = vsel %vm69, %v1907, 0.0
    %v1917 = vadd.f32 %v1915, %v1916
    %v1918 = vsel %vm69, %v1834, 0.0
    %v1919 = vsel %vm69, %v1859, 0.0
    %v1920 = vadd.f32 %v1918, %v1919
    %v1921 = vsel %vm69, %v1884, 0.0
    %v1922 = vadd.f32 %v1920, %v1921
    %v1923 = vsel %vm69, %v1909, 0.0
    %v1924 = vadd.f32 %v1922, %v1923
    %s1925 = scalar_lea.vmem %s4, 1
    %v1926 = vld [vmem:[%s1925] sm:$0x1]
    %v1928 = vperm.slane %v1926, 0
    %v1930 = vadd.f32 %v1917, %v1928
    %v1931 = vadd.f32 %v1924, %v1928
    %v1932 = vadd.f32 %v1272, %v1930
    %v1933 = vadd.f32 %v1273, %v1931
    %v1934 = vsel %vm69, %v1932, 0.0
    %1935 = vadd.xlane.f32.xlu0 %v1934
    %v1936 = vpop.xlane.xlu0 %1935
    %v1937 = vsel %vm69, %v1933, 0.0
    %1938 = vadd.xlane.f32.xlu0 %v1937
    %v1939 = vpop.xlane.xlu0 %1938
    %v1940 = vmul.f32 %v1936, %v719
    %v1941 = vmul.f32 %v1939, %v719
    %v1942 = vsub.f32 %v1932, %v1940
    %v1943 = vsub.f32 %v1933, %v1941
    %v1944 = vmul.f32 %v1942, %v1942
    %v1945 = vmul.f32 %v1943, %v1943
    %v1946 = vsel %vm69, %v1944, 0.0
    %1947 = vadd.xlane.f32.xlu0 %v1946
    %v1948 = vpop.xlane.xlu0 %1947
    %v1949 = vsel %vm69, %v1945, 0.0
    %1950 = vadd.xlane.f32.xlu0 %v1949
    %v1951 = vpop.xlane.xlu0 %1950
    %v1952 = vmul.f32 %v1948, %v719
    %v1953 = vmul.f32 %v1951, %v719
    %v1954 = vadd.f32 %v1952, 1e-05
    %v1955 = vadd.f32 %v1953, 1e-05
    %v1956 = vrsqrt.pop %v1954
    %v1957 = vmul.f32 %v1956, %v1954
    %v1958 = vmul.f32 %v1957, %v1956
    %v1959 = vmul.f32 0.5, %v1958
    %v1960 = vsub.f32 1.5, %v1959
    %v1961 = vmul.f32 %v1956, %v1960
    %vm1962 = vweird.f32 %v1954
    %vm1963 = vweird.f32 %v1956
    %vm1964 = vmor %vm1962, %vm1963
    %v1965 = vsel %vm1964, %v1956, %v1961
    %v1966 = vrsqrt.pop %v1955
    %v1967 = vmul.f32 %v1966, %v1955
    %v1968 = vmul.f32 %v1967, %v1966
    %v1969 = vmul.f32 0.5, %v1968
    %v1970 = vsub.f32 1.5, %v1969
    %v1971 = vmul.f32 %v1966, %v1970
    %vm1972 = vweird.f32 %v1955
    %vm1973 = vweird.f32 %v1966
    %vm1974 = vmor %vm1972, %vm1973
    %v1975 = vsel %vm1974, %v1966, %v1971
    %v1976 = vmul.f32 %v1942, %v1965
    %v1977 = vmul.f32 %v1943, %v1975
    %s1978 = scalar_lea.vmem %s5, 1
    %v1979 = vld [vmem:[%s1978] sm:$0x1]
    %v1981 = vperm.slane %v1979, 0
    %v1983 = vmul.f32 %v1976, %v1981
    %v1984 = vmul.f32 %v1977, %v1981
    %s1985 = scalar_lea.vmem %s6, 1
    %v1986 = vld [vmem:[%s1985] sm:$0x1]
    %v1988 = vperm.slane %v1986, 0
    %v1990 = vadd.f32 %v1983, %v1988
    %v1991 = vadd.f32 %v1984, %v1988
    %v1992 = vpack.c.bf16 %v1991, %v1990
    %s1993 = scalar_lea.vmem %s7, 64
    %v1994 = vld [vmem:[%s1993] sm:$0xff]
    %v1995 = vld [vmem:[%s1993 + $0x8] sm:$0xff]
    %v1996 = vld [vmem:[%s1993 + $0x10] sm:$0xff]
    %v1997 = vld [vmem:[%s1993 + $0x18] sm:$0xff]
    %v1998 = vld [vmem:[%s1993 + $0x20] sm:$0xff]
    %v1999 = vld [vmem:[%s1993 + $0x28] sm:$0xff]
    %v2000 = vld [vmem:[%s1993 + $0x30] sm:$0xff]
    %v2001 = vld [vmem:[%s1993 + $0x38] sm:$0xff]
    %s2002 = scalar_lea.vmem %s8, 4
    %v2003 = vld [vmem:[%s2002] sm:$0xf]
    %v2005 = vperm.slane %v2003, 0
    %v2006 = vperm.slane %v2003, 1
    %v2007 = vperm.slane %v2003, 2
    %v2008 = vperm.slane %v2003, 3
    %v2021 = vunpack.c.l.b16 %v1994
    %v2022 = vunpack.c.h.b16 %v1994
    %v2023 = vunpack.c.l.b16 %v1995
    %v2024 = vunpack.c.h.b16 %v1995
    %v2025 = vunpack.c.l.b16 %v1996
    %v2026 = vunpack.c.h.b16 %v1996
    %v2027 = vunpack.c.l.b16 %v1997
    %v2028 = vunpack.c.h.b16 %v1997
    %v2029 = vunpack.c.l.b16 %v1998
    %v2030 = vunpack.c.h.b16 %v1998
    %v2031 = vunpack.c.l.b16 %v1999
    %v2032 = vunpack.c.h.b16 %v1999
    %v2033 = vunpack.c.l.b16 %v2000
    %v2034 = vunpack.c.h.b16 %v2000
    %v2035 = vunpack.c.l.b16 %v2001
    %v2036 = vunpack.c.h.b16 %v2001
    %v2037 = vpack.c.b16 %v2025, %v2021
    %v2038 = vpack.c.b16 %v2026, %v2022
    %v2039 = vpack.c.b16 %v2027, %v2023
    %v2040 = vpack.c.b16 %v2028, %v2024
    %v2041 = vpack.c.b16 %v2033, %v2029
    %v2042 = vpack.c.b16 %v2034, %v2030
    %v2043 = vpack.c.b16 %v2035, %v2031
    %v2044 = vpack.c.b16 %v2036, %v2032
    %v2054 = vsel %vm69, %v1992, 0
    %2056 = vmatpush.bf16.msra.mxu0 0
    %2057 = vmatpush.bf16.msra.mxu0 0
    %2058 = vmatpush.bf16.msra.mxu0 0
    %2059 = vmatpush.bf16.msra.mxu0 0
    %2060 = vmatpush.bf16.msra.mxu0 0
    %2061 = vmatpush.bf16.msra.mxu0 0
    %2062 = vmatpush.bf16.msra.mxu0 %v2041
    %2063 = vmatpush.bf16.msra.mxu0 %v2037
    %2064 = vmatmul.bf16.gmra.mxu0 %v2054
    %v2065 = vpop.f32.mrf.mxu0
    %v2066 = vadd.f32 %v2005, %v2065
    %v2067 = vpop.f32.mrf.mxu0
    %v2068 = vadd.f32 %v2005, %v2067
    %2069 = vdwg.mxu0
    %2070 = vmatpush.bf16.msra.mxu0 0
    %2071 = vmatpush.bf16.msra.mxu0 0
    %2072 = vmatpush.bf16.msra.mxu0 0
    %2073 = vmatpush.bf16.msra.mxu0 0
    %2074 = vmatpush.bf16.msra.mxu0 0
    %2075 = vmatpush.bf16.msra.mxu0 0
    %2076 = vmatpush.bf16.msra.mxu0 %v2042
    %2077 = vmatpush.bf16.msra.mxu0 %v2038
    %2078 = vmatmul.bf16.gmra.mxu0 %v2054
    %v2079 = vpop.f32.mrf.mxu0
    %v2080 = vadd.f32 %v2006, %v2079
    %v2081 = vpop.f32.mrf.mxu0
    %v2082 = vadd.f32 %v2006, %v2081
    %2083 = vdwg.mxu0
    %2084 = vmatpush.bf16.msra.mxu0 0
    %2085 = vmatpush.bf16.msra.mxu0 0
    %2086 = vmatpush.bf16.msra.mxu0 0
    %2087 = vmatpush.bf16.msra.mxu0 0
    %2088 = vmatpush.bf16.msra.mxu0 0
    %2089 = vmatpush.bf16.msra.mxu0 0
    %2090 = vmatpush.bf16.msra.mxu0 %v2043
    %2091 = vmatpush.bf16.msra.mxu0 %v2039
    %2092 = vmatmul.bf16.gmra.mxu0 %v2054
    %v2093 = vpop.f32.mrf.mxu0
    %v2094 = vadd.f32 %v2007, %v2093
    %v2095 = vpop.f32.mrf.mxu0
    %v2096 = vadd.f32 %v2007, %v2095
    %2097 = vdwg.mxu0
    %2098 = vmatpush.bf16.msra.mxu0 0
    %2099 = vmatpush.bf16.msra.mxu0 0
    %2100 = vmatpush.bf16.msra.mxu0 0
    %2101 = vmatpush.bf16.msra.mxu0 0
    %2102 = vmatpush.bf16.msra.mxu0 0
    %2103 = vmatpush.bf16.msra.mxu0 0
    %2104 = vmatpush.bf16.msra.mxu0 %v2044
    %2105 = vmatpush.bf16.msra.mxu0 %v2040
    %2106 = vmatmul.bf16.gmra.mxu0 %v2054
    %v2107 = vpop.f32.mrf.mxu0
    %v2108 = vadd.f32 %v2008, %v2107
    %v2109 = vpop.f32.mrf.mxu0
    %v2110 = vadd.f32 %v2008, %v2109
    %2111 = vdwg.mxu0
    %v2112 = vmax.f32 %v2066, 0.0
    %v2113 = vmax.f32 %v2080, 0.0
    %v2114 = vmax.f32 %v2094, 0.0
    %v2115 = vmax.f32 %v2108, 0.0
    %v2116 = vmax.f32 %v2068, 0.0
    %v2117 = vmax.f32 %v2082, 0.0
    %v2118 = vmax.f32 %v2096, 0.0
    %v2119 = vmax.f32 %v2110, 0.0
    %v2120 = vpack.c.bf16 %v2116, %v2112
    %v2121 = vpack.c.bf16 %v2117, %v2113
    %v2122 = vpack.c.bf16 %v2118, %v2114
    %v2123 = vpack.c.bf16 %v2119, %v2115
    %s2124 = scalar_lea.vmem %s9, 256
    %v2125 = vld [vmem:[%s2124] sm:$0xf]
    %v2126 = vld [vmem:[%s2124 + $0x4] sm:$0xf]
    %v2127 = vld [vmem:[%s2124 + $0x8] sm:$0xf]
    %v2128 = vld [vmem:[%s2124 + $0xc] sm:$0xf]
    %v2129 = vld [vmem:[%s2124 + $0x10] sm:$0xf]
    %v2130 = vld [vmem:[%s2124 + $0x14] sm:$0xf]
    %v2131 = vld [vmem:[%s2124 + $0x18] sm:$0xf]
    %v2132 = vld [vmem:[%s2124 + $0x1c] sm:$0xf]
    %v2133 = vld [vmem:[%s2124 + $0x20] sm:$0xf]
    %v2134 = vld [vmem:[%s2124 + $0x24] sm:$0xf]
    %v2135 = vld [vmem:[%s2124 + $0x28] sm:$0xf]
    %v2136 = vld [vmem:[%s2124 + $0x2c] sm:$0xf]
    %v2137 = vld [vmem:[%s2124 + $0x30] sm:$0xf]
    %v2138 = vld [vmem:[%s2124 + $0x34] sm:$0xf]
    %v2139 = vld [vmem:[%s2124 + $0x38] sm:$0xf]
    %v2140 = vld [vmem:[%s2124 + $0x3c] sm:$0xf]
    %v2141 = vld [vmem:[%s2124 + $0x40] sm:$0xf]
    %v2142 = vld [vmem:[%s2124 + $0x44] sm:$0xf]
    %v2143 = vld [vmem:[%s2124 + $0x48] sm:$0xf]
    %v2144 = vld [vmem:[%s2124 + $0x4c] sm:$0xf]
    %v2145 = vld [vmem:[%s2124 + $0x50] sm:$0xf]
    %v2146 = vld [vmem:[%s2124 + $0x54] sm:$0xf]
    %v2147 = vld [vmem:[%s2124 + $0x58] sm:$0xf]
    %v2148 = vld [vmem:[%s2124 + $0x5c] sm:$0xf]
    %v2149 = vld [vmem:[%s2124 + $0x60] sm:$0xf]
    %v2150 = vld [vmem:[%s2124 + $0x64] sm:$0xf]
    %v2151 = vld [vmem:[%s2124 + $0x68] sm:$0xf]
    %v2152 = vld [vmem:[%s2124 + $0x6c] sm:$0xf]
    %v2153 = vld [vmem:[%s2124 + $0x70] sm:$0xf]
    %v2154 = vld [vmem:[%s2124 + $0x74] sm:$0xf]
    %v2155 = vld [vmem:[%s2124 + $0x78] sm:$0xf]
    %v2156 = vld [vmem:[%s2124 + $0x7c] sm:$0xf]
    %v2157 = vld [vmem:[%s2124 + $0x80] sm:$0xf]
    %v2158 = vld [vmem:[%s2124 + $0x84] sm:$0xf]
    %v2159 = vld [vmem:[%s2124 + $0x88] sm:$0xf]
    %v2160 = vld [vmem:[%s2124 + $0x8c] sm:$0xf]
    %v2161 = vld [vmem:[%s2124 + $0x90] sm:$0xf]
    %v2162 = vld [vmem:[%s2124 + $0x94] sm:$0xf]
    %v2163 = vld [vmem:[%s2124 + $0x98] sm:$0xf]
    %v2164 = vld [vmem:[%s2124 + $0x9c] sm:$0xf]
    %v2165 = vld [vmem:[%s2124 + $0xa0] sm:$0xf]
    %v2166 = vld [vmem:[%s2124 + $0xa4] sm:$0xf]
    %v2167 = vld [vmem:[%s2124 + $0xa8] sm:$0xf]
    %v2168 = vld [vmem:[%s2124 + $0xac] sm:$0xf]
    %v2169 = vld [vmem:[%s2124 + $0xb0] sm:$0xf]
    %v2170 = vld [vmem:[%s2124 + $0xb4] sm:$0xf]
    %v2171 = vld [vmem:[%s2124 + $0xb8] sm:$0xf]
    %v2172 = vld [vmem:[%s2124 + $0xbc] sm:$0xf]
    %v2173 = vld [vmem:[%s2124 + $0xc0] sm:$0xf]
    %v2174 = vld [vmem:[%s2124 + $0xc4] sm:$0xf]
    %v2175 = vld [vmem:[%s2124 + $0xc8] sm:$0xf]
    %v2176 = vld [vmem:[%s2124 + $0xcc] sm:$0xf]
    %v2177 = vld [vmem:[%s2124 + $0xd0] sm:$0xf]
    %v2178 = vld [vmem:[%s2124 + $0xd4] sm:$0xf]
    %v2179 = vld [vmem:[%s2124 + $0xd8] sm:$0xf]
    %v2180 = vld [vmem:[%s2124 + $0xdc] sm:$0xf]
    %v2181 = vld [vmem:[%s2124 + $0xe0] sm:$0xf]
    %v2182 = vld [vmem:[%s2124 + $0xe4] sm:$0xf]
    %v2183 = vld [vmem:[%s2124 + $0xe8] sm:$0xf]
    %v2184 = vld [vmem:[%s2124 + $0xec] sm:$0xf]
    %v2185 = vld [vmem:[%s2124 + $0xf0] sm:$0xf]
    %v2186 = vld [vmem:[%s2124 + $0xf4] sm:$0xf]
    %v2187 = vld [vmem:[%s2124 + $0xf8] sm:$0xf]
    %v2188 = vld [vmem:[%s2124 + $0xfc] sm:$0xf]
    %s2189 = scalar_lea.vmem %s10, 1
    %v2190 = vld [vmem:[%s2189] sm:$0x1]
    %v2192 = vperm.slane %v2190, 0
    %v2258 = vunpack.c.l.b16 %v2125
    %v2259 = vunpack.c.l.b16 %v2126
    %v2260 = vunpack.c.l.b16 %v2127
    %v2261 = vunpack.c.l.b16 %v2128
    %v2262 = vunpack.c.l.b16 %v2129
    %v2263 = vunpack.c.l.b16 %v2130
    %v2264 = vunpack.c.l.b16 %v2131
    %v2265 = vunpack.c.l.b16 %v2132
    %v2266 = vunpack.c.l.b16 %v2133
    %v2267 = vunpack.c.l.b16 %v2134
    %v2268 = vunpack.c.l.b16 %v2135
    %v2269 = vunpack.c.l.b16 %v2136
    %v2270 = vunpack.c.l.b16 %v2137
    %v2271 = vunpack.c.l.b16 %v2138
    %v2272 = vunpack.c.l.b16 %v2139
    %v2273 = vunpack.c.l.b16 %v2140
    %v2274 = vunpack.c.l.b16 %v2141
    %v2275 = vunpack.c.l.b16 %v2142
    %v2276 = vunpack.c.l.b16 %v2143
    %v2277 = vunpack.c.l.b16 %v2144
    %v2278 = vunpack.c.l.b16 %v2145
    %v2279 = vunpack.c.l.b16 %v2146
    %v2280 = vunpack.c.l.b16 %v2147
    %v2281 = vunpack.c.l.b16 %v2148
    %v2282 = vunpack.c.l.b16 %v2149
    %v2283 = vunpack.c.l.b16 %v2150
    %v2284 = vunpack.c.l.b16 %v2151
    %v2285 = vunpack.c.l.b16 %v2152
    %v2286 = vunpack.c.l.b16 %v2153
    %v2287 = vunpack.c.l.b16 %v2154
    %v2288 = vunpack.c.l.b16 %v2155
    %v2289 = vunpack.c.l.b16 %v2156
    %v2290 = vunpack.c.l.b16 %v2157
    %v2291 = vunpack.c.l.b16 %v2158
    %v2292 = vunpack.c.l.b16 %v2159
    %v2293 = vunpack.c.l.b16 %v2160
    %v2294 = vunpack.c.l.b16 %v2161
    %v2295 = vunpack.c.l.b16 %v2162
    %v2296 = vunpack.c.l.b16 %v2163
    %v2297 = vunpack.c.l.b16 %v2164
    %v2298 = vunpack.c.l.b16 %v2165
    %v2299 = vunpack.c.l.b16 %v2166
    %v2300 = vunpack.c.l.b16 %v2167
    %v2301 = vunpack.c.l.b16 %v2168
    %v2302 = vunpack.c.l.b16 %v2169
    %v2303 = vunpack.c.l.b16 %v2170
    %v2304 = vunpack.c.l.b16 %v2171
    %v2305 = vunpack.c.l.b16 %v2172
    %v2306 = vunpack.c.l.b16 %v2173
    %v2307 = vunpack.c.l.b16 %v2174
    %v2308 = vunpack.c.l.b16 %v2175
    %v2309 = vunpack.c.l.b16 %v2176
    %v2310 = vunpack.c.l.b16 %v2177
    %v2311 = vunpack.c.l.b16 %v2178
    %v2312 = vunpack.c.l.b16 %v2179
    %v2313 = vunpack.c.l.b16 %v2180
    %v2314 = vunpack.c.l.b16 %v2181
    %v2315 = vunpack.c.l.b16 %v2182
    %v2316 = vunpack.c.l.b16 %v2183
    %v2317 = vunpack.c.l.b16 %v2184
    %v2318 = vunpack.c.l.b16 %v2185
    %v2319 = vunpack.c.l.b16 %v2186
    %v2320 = vunpack.c.l.b16 %v2187
    %v2321 = vunpack.c.l.b16 %v2188
    %v2322 = vpack.c.b16 %v2259, %v2258
    %v2323 = vpack.c.b16 %v2261, %v2260
    %v2324 = vpack.c.b16 %v2263, %v2262
    %v2325 = vpack.c.b16 %v2265, %v2264
    %v2326 = vpack.c.b16 %v2267, %v2266
    %v2327 = vpack.c.b16 %v2269, %v2268
    %v2328 = vpack.c.b16 %v2271, %v2270
    %v2329 = vpack.c.b16 %v2273, %v2272
    %v2330 = vpack.c.b16 %v2275, %v2274
    %v2331 = vpack.c.b16 %v2277, %v2276
    %v2332 = vpack.c.b16 %v2279, %v2278
    %v2333 = vpack.c.b16 %v2281, %v2280
    %v2334 = vpack.c.b16 %v2283, %v2282
    %v2335 = vpack.c.b16 %v2285, %v2284
    %v2336 = vpack.c.b16 %v2287, %v2286
    %v2337 = vpack.c.b16 %v2289, %v2288
    %v2338 = vpack.c.b16 %v2291, %v2290
    %v2339 = vpack.c.b16 %v2293, %v2292
    %v2340 = vpack.c.b16 %v2295, %v2294
    %v2341 = vpack.c.b16 %v2297, %v2296
    %v2342 = vpack.c.b16 %v2299, %v2298
    %v2343 = vpack.c.b16 %v2301, %v2300
    %v2344 = vpack.c.b16 %v2303, %v2302
    %v2345 = vpack.c.b16 %v2305, %v2304
    %v2346 = vpack.c.b16 %v2307, %v2306
    %v2347 = vpack.c.b16 %v2309, %v2308
    %v2348 = vpack.c.b16 %v2311, %v2310
    %v2349 = vpack.c.b16 %v2313, %v2312
    %v2350 = vpack.c.b16 %v2315, %v2314
    %v2351 = vpack.c.b16 %v2317, %v2316
    %v2352 = vpack.c.b16 %v2319, %v2318
    %v2353 = vpack.c.b16 %v2321, %v2320
    %2386 = vmatpush.bf16.msra.mxu0 %v2329
    %2387 = vmatpush.bf16.msra.mxu0 %v2328
    %2388 = vmatpush.bf16.msra.mxu0 %v2327
    %2389 = vmatpush.bf16.msra.mxu0 %v2326
    %2390 = vmatpush.bf16.msra.mxu0 %v2325
    %2391 = vmatpush.bf16.msra.mxu0 %v2324
    %2392 = vmatpush.bf16.msra.mxu0 %v2323
    %2393 = vmatpush.bf16.msra.mxu0 %v2322
    %2394 = vmatmul.bf16.gmra.mxu0 %v2120
    %v2395 = vpop.f32.mrf.mxu0
    %v2396 = vadd.f32 %v2192, %v2395
    %v2397 = vpop.f32.mrf.mxu0
    %v2398 = vadd.f32 %v2192, %v2397
    %2399 = vdwg.mxu0
    %2400 = vmatpush.bf16.msra.mxu0 %v2337
    %2401 = vmatpush.bf16.msra.mxu0 %v2336
    %2402 = vmatpush.bf16.msra.mxu0 %v2335
    %2403 = vmatpush.bf16.msra.mxu0 %v2334
    %2404 = vmatpush.bf16.msra.mxu0 %v2333
    %2405 = vmatpush.bf16.msra.mxu0 %v2332
    %2406 = vmatpush.bf16.msra.mxu0 %v2331
    %2407 = vmatpush.bf16.msra.mxu0 %v2330
    %2408 = vmatmul.bf16.gmra.mxu0 %v2121
    %v2409 = vpop.f32.mrf.mxu0
    %v2410 = vadd.f32 %v2396, %v2409
    %v2411 = vpop.f32.mrf.mxu0
    %v2412 = vadd.f32 %v2398, %v2411
    %2413 = vdwg.mxu0
    %2414 = vmatpush.bf16.msra.mxu0 %v2345
    %2415 = vmatpush.bf16.msra.mxu0 %v2344
    %2416 = vmatpush.bf16.msra.mxu0 %v2343
    %2417 = vmatpush.bf16.msra.mxu0 %v2342
    %2418 = vmatpush.bf16.msra.mxu0 %v2341
    %2419 = vmatpush.bf16.msra.mxu0 %v2340
    %2420 = vmatpush.bf16.msra.mxu0 %v2339
    %2421 = vmatpush.bf16.msra.mxu0 %v2338
    %2422 = vmatmul.bf16.gmra.mxu0 %v2122
    %v2423 = vpop.f32.mrf.mxu0
    %v2424 = vadd.f32 %v2410, %v2423
    %v2425 = vpop.f32.mrf.mxu0
    %v2426 = vadd.f32 %v2412, %v2425
    %2427 = vdwg.mxu0
    %2428 = vmatpush.bf16.msra.mxu0 %v2353
    %2429 = vmatpush.bf16.msra.mxu0 %v2352
    %2430 = vmatpush.bf16.msra.mxu0 %v2351
    %2431 = vmatpush.bf16.msra.mxu0 %v2350
    %2432 = vmatpush.bf16.msra.mxu0 %v2349
    %2433 = vmatpush.bf16.msra.mxu0 %v2348
    %2434 = vmatpush.bf16.msra.mxu0 %v2347
    %2435 = vmatpush.bf16.msra.mxu0 %v2346
    %2436 = vmatmul.bf16.gmra.mxu0 %v2123
    %v2437 = vpop.f32.mrf.mxu0
    %v2438 = vadd.f32 %v2424, %v2437
    %v2439 = vpop.f32.mrf.mxu0
    %v2440 = vadd.f32 %v2426, %v2439
    %2441 = vdwg.mxu0
    %v2442 = vadd.f32 %v1990, %v2438
    %v2443 = vadd.f32 %v1991, %v2440
    %v2444 = vsel %vm69, %v2442, 0.0
    %2445 = vadd.xlane.f32.xlu0 %v2444
    %v2446 = vpop.xlane.xlu0 %2445
    %v2447 = vsel %vm69, %v2443, 0.0
    %2448 = vadd.xlane.f32.xlu0 %v2447
    %v2449 = vpop.xlane.xlu0 %2448
    %v2450 = vmul.f32 %v2446, %v719
    %v2451 = vmul.f32 %v2449, %v719
    %v2452 = vsub.f32 %v2442, %v2450
    %v2453 = vsub.f32 %v2443, %v2451
    %v2454 = vmul.f32 %v2452, %v2452
    %v2455 = vmul.f32 %v2453, %v2453
    %v2456 = vsel %vm69, %v2454, 0.0
    %2457 = vadd.xlane.f32.xlu0 %v2456
    %v2458 = vpop.xlane.xlu0 %2457
    %v2459 = vsel %vm69, %v2455, 0.0
    %2460 = vadd.xlane.f32.xlu0 %v2459
    %v2461 = vpop.xlane.xlu0 %2460
    %v2462 = vmul.f32 %v2458, %v719
    %v2463 = vmul.f32 %v2461, %v719
    %v2464 = vadd.f32 %v2462, 1e-05
    %v2465 = vadd.f32 %v2463, 1e-05
    %v2466 = vrsqrt.pop %v2464
    %v2467 = vmul.f32 %v2466, %v2464
    %v2468 = vmul.f32 %v2467, %v2466
    %v2469 = vmul.f32 0.5, %v2468
    %v2470 = vsub.f32 1.5, %v2469
    %v2471 = vmul.f32 %v2466, %v2470
    %vm2472 = vweird.f32 %v2464
    %vm2473 = vweird.f32 %v2466
    %vm2474 = vmor %vm2472, %vm2473
    %v2475 = vsel %vm2474, %v2466, %v2471
    %v2476 = vrsqrt.pop %v2465
    %v2477 = vmul.f32 %v2476, %v2465
    %v2478 = vmul.f32 %v2477, %v2476
    %v2479 = vmul.f32 0.5, %v2478
    %v2480 = vsub.f32 1.5, %v2479
    %v2481 = vmul.f32 %v2476, %v2480
    %vm2482 = vweird.f32 %v2465
    %vm2483 = vweird.f32 %v2476
    %vm2484 = vmor %vm2482, %vm2483
    %v2485 = vsel %vm2484, %v2476, %v2481
    %v2486 = vmul.f32 %v2452, %v2475
    %v2487 = vmul.f32 %v2453, %v2485
    %s2488 = scalar_lea.vmem %s11, 1
    %v2489 = vld [vmem:[%s2488] sm:$0x1]
    %v2491 = vperm.slane %v2489, 0
    %v2493 = vmul.f32 %v2486, %v2491
    %v2494 = vmul.f32 %v2487, %v2491
    %s2495 = scalar_lea.vmem %s12, 1
    %v2496 = vld [vmem:[%s2495] sm:$0x1]
    %v2498 = vperm.slane %v2496, 0
    %v2500 = vadd.f32 %v2493, %v2498
    %v2501 = vadd.f32 %v2494, %v2498
    %2502 = vst.msk [vmem:[#allocation2] sm:$0xff] %vm69, %v2500
    %2503 = vst.msk [vmem:[#allocation2 + $0x8] sm:$0xff] %vm69, %v2501
    // Predicated region
    $region54: #{tpu_custom_call.1} parent=1 // pred_check
      _
    $region55: #{tpu_custom_call.1} parent=1 // pred_check_branch
      %2505 = sbr.rel (0) target = $region57
    $region56: #{tpu_custom_call.1} parent=1 // pred_region
      %2507 = vsyncadd [#allocation3], 0
      %s2508 = sshll.u32 [#allocation2], 4
      %s2509 = int_to_ptr.vmem [resolvable:$true] %s2508
      %s2510 = sshll.u32 %s13, 4
      %s2511 = int_to_ptr.hbm [resolvable:$true] %s2510
      %2516 = dma.vmem_to_hbm [thread:$0]  %s2509, 256, %s2511, [#allocation3], 128, 128, 8
    $region57: #{tpu_custom_call.1} parent=1 // pred_fallthru
      _
    // Predicated region
    $region58: #{tpu_custom_call.1} parent=1 // pred_check
      _
    $region59: #{tpu_custom_call.1} parent=1 // pred_check_branch
      %2518 = sbr.rel (0) target = $region61
    $region60: #{tpu_custom_call.1} parent=1 // pred_region
      %2520 = dma.done [#allocation3], 256
    $region61: #{tpu_custom_call.1} parent=1 // pred_fallthru
      _
    %2521 = vsyncpa [#allocation3], 1

</llo_original>
